<compile_context>
chip_gen: v7x
topology: tpu7x:2x2x1
jax: 0.10.0
libtpu: 0.0.40
codegen_flags: <defaults>
</compile_context>

<pallas_src>
import functools

import jax
import jax.numpy as jnp
import numpy as np
from jax.experimental import pallas as pl
from jax.experimental.pallas import tpu as pltpu


# ------------------------------------------------------------------- kernel --
def fused_forward_kernel(
    xu_ref, wu_ref, bu_ref, xp_ref, wp_ref, bp_ref,      # encoders
    aui_ref, aiu_ref,                                     # bipartite adjacency blocks
    wl_ref, wr_ref, bl_ref,                               # per-layer SAGE weights
    wc1a_ref, wc1b_ref, bc1_ref,                          # hidden_common1 (split contraction)
    wc2_ref, bc2_ref,                                     # hidden_common2
    wht_ref, bht_ref,                                     # batched hidden_{control|treatment}
    wo_ref, bo_ref,                                       # batched out_{control|treatment}
    out_ref,                                              # [Nu, 2*half + 2*out_ch] packed slab
    emb_sc, hacc_sc,                                      # VMEM scratch
    *, nu, n_hh):
    """Whole forward pass; grid axis = SAGE layer index (emb carried in VMEM)."""
    l = pl.program_id(0)

    # ---- step 0: fused encoders + head-accumulator init (no row concat) ----
    @pl.when(l == 0)
    def _init():
        xu_e = jnp.dot(xu_ref[...], wu_ref[...],
                       preferred_element_type=jnp.float32) + bu_ref[...]
        emb_sc[:nu, :] = xu_e
        emb_sc[nu:, :] = jnp.dot(xp_ref[...], wp_ref[...],
                                 preferred_element_type=jnp.float32) + bp_ref[...]
        # hidden_common1 contraction, first block of Wc1 (acts on xu_e)
        hacc_sc[...] = jnp.dot(xu_e, wc1a_ref[...], preferred_element_type=jnp.float32)

    # ---- one SAGEConv layer (mean aggr, root_weight=True) ----
    x = emb_sc[...]                                                       # [N, H]
    xwl = jnp.dot(x, wl_ref[...], preferred_element_type=jnp.float32)     # neighbour branch
    xwr = jnp.dot(x, wr_ref[...], preferred_element_type=jnp.float32)     # root branch
    # bipartite aggregation: A @ (x @ Wl) using only the off-diagonal A blocks
    y_u = jnp.maximum(
        jnp.dot(aui_ref[...], xwl[nu:, :], preferred_element_type=jnp.float32)
        + xwr[:nu, :] + bl_ref[...], 0.0)                                 # [Nu, H]
    y_i = jnp.maximum(
        jnp.dot(aiu_ref[...], xwl[:nu, :], preferred_element_type=jnp.float32)
        + xwr[nu:, :] + bl_ref[...], 0.0)                                 # [Np, H]
    emb_sc[:nu, :] = y_u
    emb_sc[nu:, :] = y_i
    # incremental hidden_common1: this layer's user slice times its Wc1 block
    hacc_sc[...] += jnp.dot(y_u, wc1b_ref[...], preferred_element_type=jnp.float32)

    # ---- last step: rest of the prediction head, one lane-packed output ----
    @pl.when(l == pl.num_programs(0) - 1)
    def _head():
        h = jnp.maximum(hacc_sc[...] + bc1_ref[...], 0.0)                 # hidden_common1
        h = jnp.maximum(jnp.dot(h, wc2_ref[...],
                                preferred_element_type=jnp.float32) + bc2_ref[...], 0.0)
        hh = jnp.maximum(jnp.dot(h, wht_ref[...],
                                 preferred_element_type=jnp.float32) + bht_ref[...], 0.0)
        oo = jnp.maximum(jnp.dot(hh, wo_ref[...],
                                 preferred_element_type=jnp.float32) + bo_ref[...], 0.0)
        out_ref[...] = jnp.concatenate([hh, oo], axis=1)                  # single packed store


# ------------------------------------------------------- one-time param prep --
def prepare_params(params, num_layers):
    """Pack / reshape torch-layout weights once (hoisted out of the forward path)."""
    H = params["Wu"].shape[1]
    half = params["Wctl"].shape[1]
    out_ch = params["Woc"].shape[1]
    wo_bd = jnp.zeros((2 * half, 2 * out_ch), jnp.float32)
    wo_bd = wo_bd.at[:half, :out_ch].set(params["Woc"]).at[half:, out_ch:].set(params["Wot"])
    return {
        "Wu": params["Wu"], "bu": params["bu"].reshape(1, H),
        "Wp": params["Wp"], "bp": params["bp"].reshape(1, H),
        "Wl": jnp.stack(params["Wl"]),                                    # [L, H, H]
        "Wr": jnp.stack(params["Wr"]),                                    # [L, H, H]
        "bl": jnp.stack([b.reshape(1, H) for b in params["bl"]]),         # [L, 1, H]
        "Wc1a": params["Wc1"][:H],                                        # acts on xu_e
        "Wc1b": params["Wc1"][H:].reshape(num_layers, H, H),              # per-layer blocks
        "bc1": params["bc1"].reshape(1, H),
        "Wc2": params["Wc2"], "bc2": params["bc2"].reshape(1, H),
        "Wht": jnp.concatenate([params["Wctl"], params["Wtrt"]], axis=1),  # [H, 2*half]
        "bht": jnp.concatenate([params["bctl"], params["btrt"]]).reshape(1, -1),
        "Wo": wo_bd,                                                      # block-diag twin heads
        "bo": jnp.concatenate([params["boc"], params["bot"]]).reshape(1, -1),
    }


# ------------------------------------------------------------ model forward --
def bipartite_sage_forward(prep, xu, xp, A):
    Nu, nfeat = xu.shape
    Np_, nprod = xp.shape
    N = Nu + Np_
    H = prep["Wu"].shape[1]
    L = prep["Wl"].shape[0]
    n_hh = prep["Wht"].shape[1]          # 2 * (hidden // 2)
    n_oo = prep["Wo"].shape[1]           # 2 * out_channels

    # bipartite shortcut: only the off-diagonal blocks of A are non-zero
    A_ui = A[:Nu, Nu:]                   # user <- item
    A_iu = A[Nu:, :Nu]                   # item <- user

    def const_spec(shape):               # full block, constant index -> VMEM-resident
        return pl.BlockSpec(shape, lambda l: (0,) * len(shape))

    def layer_spec(shape):               # one per-layer slice, leading dim squeezed
        return pl.BlockSpec(shape, lambda l: (l, 0, 0))

    kernel = functools.partial(fused_forward_kernel, nu=Nu, n_hh=n_hh)
    out = pl.pallas_call(
        kernel,
        out_shape=jax.ShapeDtypeStruct((Nu, n_hh + n_oo), jnp.float32),
        grid=(L,),
        in_specs=[
            const_spec((Nu, nfeat)), const_spec((nfeat, H)), const_spec((1, H)),
            const_spec((Np_, nprod)), const_spec((nprod, H)), const_spec((1, H)),
            const_spec((Nu, Np_)), const_spec((Np_, Nu)),
            layer_spec((None, H, H)), layer_spec((None, H, H)), layer_spec((None, 1, H)),
            const_spec((H, H)), layer_spec((None, H, H)), const_spec((1, H)),
            const_spec((H, H)), const_spec((1, H)),
            const_spec((H, n_hh)), const_spec((1, n_hh)),
            const_spec((n_hh, n_oo)), const_spec((1, n_oo)),
        ],
        out_specs=pl.BlockSpec((Nu, n_hh + n_oo), lambda l: (0, 0)),
        scratch_shapes=[pltpu.VMEM((N, H), jnp.float32),    # emb carried across layers
                        pltpu.VMEM((Nu, H), jnp.float32)],  # hidden_common1 accumulator
        compiler_params=pltpu.CompilerParams(dimension_semantics=("arbitrary",)),
    )(xu, prep["Wu"], prep["bu"], xp, prep["Wp"], prep["bp"],
      A_ui, A_iu,
      prep["Wl"], prep["Wr"], prep["bl"],
      prep["Wc1a"], prep["Wc1b"], prep["bc1"],
      prep["Wc2"], prep["bc2"],
      prep["Wht"], prep["bht"],
      prep["Wo"], prep["bo"])

    half = n_hh // 2
    out_ch = n_oo // 2
    hh, oo = out[:, :n_hh], out[:, n_hh:]
    h_1t0, h_1t1 = hh[:, :half], hh[:, half:]
    out_2t0, out_2t1 = oo[:, :out_ch], oo[:, out_ch:]
    return out_2t1, out_2t0, h_1t1, h_1t0


# ---------------------------------------------------------- pure-JAX reference
def reference_forward(params, xu, xp, A, num_layers):
    def lin(x, w, b, relu):
        y = x @ w + b
        return jnp.maximum(y, 0.0) if relu else y

    Nu = xu.shape[0]
    xu_e = lin(xu, params["Wu"], params["bu"], False)
    xp_e = lin(xp, params["Wp"], params["bp"], False)
    outs = [xu_e]
    emb = jnp.concatenate([xu_e, xp_e], axis=0)
    for l in range(num_layers):
        agg = A @ emb
        emb = jnp.maximum(agg @ params["Wl"][l] + emb @ params["Wr"][l] + params["bl"][l], 0.0)
        outs.append(emb[:Nu])
    out = jnp.concatenate(outs, axis=1)
    h = lin(out, params["Wc1"], params["bc1"], True)
    h = lin(h, params["Wc2"], params["bc2"], True)
    h0 = lin(h, params["Wctl"], params["bctl"], True)
    h1 = lin(h, params["Wtrt"], params["btrt"], True)
    o0 = lin(h0, params["Woc"], params["boc"], True)
    o1 = lin(h1, params["Wot"], params["bot"], True)
    return o1, o0, h1, h0


# --------------------------------------------------------------------- main --
if __name__ == "__main__":
    # small shapes implied by the module
    Nu, Np = 16, 8                 # users / items (bipartite node sets)
    nfeat, nproduct = 12, 10       # raw feature dims
    hidden, out_ch = 32, 2
    num_layers = 2
    E = 40                         # user-item edges (both directions added)

    key = jax.random.PRNGKey(0)
    ks = jax.random.split(key, 32)
    ki = iter(range(32))

    def nk():
        return ks[next(ki)]

    def w_init(shape, scale=0.1):
        return scale * jax.random.normal(nk(), shape, dtype=jnp.float32)

    params = {
        "Wu": w_init((nfeat, hidden)),    "bu": w_init((hidden,)),
        "Wp": w_init((nproduct, hidden)), "bp": w_init((hidden,)),
        "Wl": [w_init((hidden, hidden)) for _ in range(num_layers)],   # SAGE lin_l (neighbors)
        "Wr": [w_init((hidden, hidden)) for _ in range(num_layers)],   # SAGE lin_r (root)
        "bl": [w_init((hidden,)) for _ in range(num_layers)],
        "Wc1": w_init((hidden + num_layers * hidden, hidden)), "bc1": w_init((hidden,)),
        "Wc2": w_init((hidden, hidden)),                        "bc2": w_init((hidden,)),
        "Wctl": w_init((hidden, hidden // 2)), "bctl": w_init((hidden // 2,)),
        "Wtrt": w_init((hidden, hidden // 2)), "btrt": w_init((hidden // 2,)),
        "Woc": w_init((hidden // 2, out_ch)),  "boc": w_init((out_ch,)),
        "Wot": w_init((hidden // 2, out_ch)),  "bot": w_init((out_ch,)),
    }

    xu = jax.random.normal(nk(), (Nu, nfeat), dtype=jnp.float32)
    xp = jax.random.normal(nk(), (Np, nproduct), dtype=jnp.float32)

    # bipartite edges: users [0, Nu) <-> items [Nu, Nu+Np), both directions
    users = jax.random.randint(nk(), (E,), 0, Nu)
    items = jax.random.randint(nk(), (E,), Nu, Nu + Np)
    src = jnp.concatenate([users, items])
    dst = jnp.concatenate([items, users])

    # glue: densify edge_index into a row-normalized adjacency (mean aggregation).
    # user-user / item-item blocks are exactly zero, so the kernel only uses the
    # two off-diagonal blocks.
    N = Nu + Np
    adj = jnp.zeros((N, N), jnp.float32).at[dst, src].add(1.0)
    deg = adj.sum(axis=1, keepdims=True)
    A = adj / jnp.maximum(deg, 1.0)

    prep = prepare_params(params, num_layers)        # one-time weight packing
    out_2t1, out_2t0, h_1t1, h_1t0 = bipartite_sage_forward(prep, xu, xp, A)
    jax.block_until_ready((out_2t1, out_2t0, h_1t1, h_1t0))

    # sanity-check against pure-JAX reference
    ref = reference_forward(params, xu, xp, A, num_layers)
    for got, want in zip((out_2t1, out_2t0, h_1t1, h_1t0), ref):
        np.testing.assert_allclose(np.asarray(got), np.asarray(want), rtol=1e-4, atol=1e-4)

    print("KERNEL_OK")
</pallas_src>

<mosaic_0001>
module attributes {stable_mosaic.version = 11 : i64} {
  func.func @fused_forward_kernel(%arg0: i32, %arg1: memref<16x12xf32, #tpu.memory_space<vmem>>, %arg2: memref<12x32xf32, #tpu.memory_space<vmem>>, %arg3: memref<1x32xf32, #tpu.memory_space<vmem>>, %arg4: memref<8x10xf32, #tpu.memory_space<vmem>>, %arg5: memref<10x32xf32, #tpu.memory_space<vmem>>, %arg6: memref<1x32xf32, #tpu.memory_space<vmem>>, %arg7: memref<16x8xf32, #tpu.memory_space<vmem>>, %arg8: memref<8x16xf32, #tpu.memory_space<vmem>>, %arg9: memref<1x32x32xf32, #tpu.memory_space<vmem>>, %arg10: memref<1x32x32xf32, #tpu.memory_space<vmem>>, %arg11: memref<1x1x32xf32, #tpu.memory_space<vmem>>, %arg12: memref<32x32xf32, #tpu.memory_space<vmem>>, %arg13: memref<1x32x32xf32, #tpu.memory_space<vmem>>, %arg14: memref<1x32xf32, #tpu.memory_space<vmem>>, %arg15: memref<32x32xf32, #tpu.memory_space<vmem>>, %arg16: memref<1x32xf32, #tpu.memory_space<vmem>>, %arg17: memref<32x32xf32, #tpu.memory_space<vmem>>, %arg18: memref<1x32xf32, #tpu.memory_space<vmem>>, %arg19: memref<32x4xf32, #tpu.memory_space<vmem>>, %arg20: memref<1x4xf32, #tpu.memory_space<vmem>>, %arg21: memref<16x36xf32, #tpu.memory_space<vmem>>, %arg22: memref<24x32xf32, #tpu.memory_space<vmem>>, %arg23: memref<16x32xf32, #tpu.memory_space<vmem>>) attributes {dimension_semantics = [#tpu.dimension_semantics<arbitrary>], iteration_bounds = array<i64: 2>, scalar_prefetch = 0 : i64, scratch_operands = 2 : i64, tpu.core_type = #tpu.core_type<tc>, window_params = [{pipeline_mode = #tpu.pipeline_mode<synchronous>, transform_indices = @transform_0, window_bounds = array<i64: 16, 12>}, {pipeline_mode = #tpu.pipeline_mode<synchronous>, transform_indices = @transform_1, window_bounds = array<i64: 12, 32>}, {pipeline_mode = #tpu.pipeline_mode<synchronous>, transform_indices = @transform_2, window_bounds = array<i64: 1, 32>}, {pipeline_mode = #tpu.pipeline_mode<synchronous>, transform_indices = @transform_3, window_bounds = array<i64: 8, 10>}, {pipeline_mode = #tpu.pipeline_mode<synchronous>, transform_indices = @transform_4, window_bounds = array<i64: 10, 32>}, {pipeline_mode = #tpu.pipeline_mode<synchronous>, transform_indices = @transform_5, window_bounds = array<i64: 1, 32>}, {pipeline_mode = #tpu.pipeline_mode<synchronous>, transform_indices = @transform_6, window_bounds = array<i64: 16, 8>}, {pipeline_mode = #tpu.pipeline_mode<synchronous>, transform_indices = @transform_7, window_bounds = array<i64: 8, 16>}, {transform_indices = @transform_8, window_bounds = array<i64: 1, 32, 32>}, {transform_indices = @transform_9, window_bounds = array<i64: 1, 32, 32>}, {transform_indices = @transform_10, window_bounds = array<i64: 1, 1, 32>}, {pipeline_mode = #tpu.pipeline_mode<synchronous>, transform_indices = @transform_11, window_bounds = array<i64: 32, 32>}, {transform_indices = @transform_12, window_bounds = array<i64: 1, 32, 32>}, {pipeline_mode = #tpu.pipeline_mode<synchronous>, transform_indices = @transform_13, window_bounds = array<i64: 1, 32>}, {pipeline_mode = #tpu.pipeline_mode<synchronous>, transform_indices = @transform_14, window_bounds = array<i64: 32, 32>}, {pipeline_mode = #tpu.pipeline_mode<synchronous>, transform_indices = @transform_15, window_bounds = array<i64: 1, 32>}, {pipeline_mode = #tpu.pipeline_mode<synchronous>, transform_indices = @transform_16, window_bounds = array<i64: 32, 32>}, {pipeline_mode = #tpu.pipeline_mode<synchronous>, transform_indices = @transform_17, window_bounds = array<i64: 1, 32>}, {pipeline_mode = #tpu.pipeline_mode<synchronous>, transform_indices = @transform_18, window_bounds = array<i64: 32, 4>}, {pipeline_mode = #tpu.pipeline_mode<synchronous>, transform_indices = @transform_19, window_bounds = array<i64: 1, 4>}, {pipeline_mode = #tpu.pipeline_mode<synchronous>, transform_indices = @transform_20, window_bounds = array<i64: 16, 36>}]} {
    %c0_i32 = arith.constant 0 : i32
    %0 = arith.cmpi eq, %arg0, %c0_i32 : i32
    %1 = arith.extui %0 : i1 to i32
    %c0_i32_0 = arith.constant 0 : i32
    %2 = arith.cmpi ne, %1, %c0_i32_0 : i32
    scf.if %2 {
      %c0_35 = arith.constant 0 : index
      %c0_36 = arith.constant 0 : index
      %43 = vector.load %arg1[%c0_35, %c0_36] : memref<16x12xf32, #tpu.memory_space<vmem>>, vector<16x12xf32>
      %c0_37 = arith.constant 0 : index
      %c0_38 = arith.constant 0 : index
      %44 = vector.load %arg2[%c0_37, %c0_38] : memref<12x32xf32, #tpu.memory_space<vmem>>, vector<12x32xf32>
      %cst_39 = arith.constant dense<0.000000e+00> : vector<16x32xf32>
      %45 = tpu.matmul %43, %44, %cst_39 {dimension_numbers = #tpu.dot_dimension_numbers<[1], [0], [0], [1], [0, 0, 1, 1], [], []>} : vector<16x12xf32>, vector<12x32xf32>, vector<16x32xf32> -> vector<16x32xf32>
      %c0_40 = arith.constant 0 : index
      %c0_41 = arith.constant 0 : index
      %46 = vector.load %arg3[%c0_40, %c0_41] : memref<1x32xf32, #tpu.memory_space<vmem>>, vector<1x32xf32>
      %47 = vector.broadcast %46 : vector<1x32xf32> to vector<16x32xf32>
      %48 = arith.addf %45, %47 : vector<16x32xf32>
      %c0_42 = arith.constant 0 : index
      %c0_43 = arith.constant 0 : index
      %49 = vector.load %arg22[%c0_42, %c0_43] : memref<24x32xf32, #tpu.memory_space<vmem>>, vector<16x32xf32>
      tpu.vector_store %arg22[%c0_42, %c0_43], %48 {strides = array<i32>} : memref<24x32xf32, #tpu.memory_space<vmem>>, vector<16x32xf32>,
      %c0_44 = arith.constant 0 : index
      %c0_45 = arith.constant 0 : index
      %50 = vector.load %arg4[%c0_44, %c0_45] : memref<8x10xf32, #tpu.memory_space<vmem>>, vector<8x10xf32>
      %c0_46 = arith.constant 0 : index
      %c0_47 = arith.constant 0 : index
      %51 = vector.load %arg5[%c0_46, %c0_47] : memref<10x32xf32, #tpu.memory_space<vmem>>, vector<10x32xf32>
      %cst_48 = arith.constant dense<0.000000e+00> : vector<8x32xf32>
      %52 = tpu.matmul %50, %51, %cst_48 {dimension_numbers = #tpu.dot_dimension_numbers<[1], [0], [0], [1], [0, 0, 1, 1], [], []>} : vector<8x10xf32>, vector<10x32xf32>, vector<8x32xf32> -> vector<8x32xf32>
      %c0_49 = arith.constant 0 : index
      %c0_50 = arith.constant 0 : index
      %53 = vector.load %arg6[%c0_49, %c0_50] : memref<1x32xf32, #tpu.memory_space<vmem>>, vector<1x32xf32>
      %54 = vector.broadcast %53 : vector<1x32xf32> to vector<8x32xf32>
      %55 = arith.addf %52, %54 : vector<8x32xf32>
      %c16_51 = arith.constant 16 : index
      %c0_52 = arith.constant 0 : index
      %56 = vector.load %arg22[%c16_51, %c0_52] : memref<24x32xf32, #tpu.memory_space<vmem>>, vector<8x32xf32>
      tpu.vector_store %arg22[%c16_51, %c0_52], %55 {strides = array<i32>} : memref<24x32xf32, #tpu.memory_space<vmem>>, vector<8x32xf32>,
      %c0_53 = arith.constant 0 : index
      %c0_54 = arith.constant 0 : index
      %57 = vector.load %arg12[%c0_53, %c0_54] : memref<32x32xf32, #tpu.memory_space<vmem>>, vector<32x32xf32>
      %cst_55 = arith.constant dense<0.000000e+00> : vector<16x32xf32>
      %58 = tpu.matmul %48, %57, %cst_55 {dimension_numbers = #tpu.dot_dimension_numbers<[1], [0], [0], [1], [0, 0, 1, 1], [], []>} : vector<16x32xf32>, vector<32x32xf32>, vector<16x32xf32> -> vector<16x32xf32>
      %c0_56 = arith.constant 0 : index
      %c0_57 = arith.constant 0 : index
      %59 = vector.load %arg23[%c0_56, %c0_57] : memref<16x32xf32, #tpu.memory_space<vmem>>, vector<16x32xf32>
      tpu.vector_store %arg23[%c0_56, %c0_57], %58 {strides = array<i32>} : memref<16x32xf32, #tpu.memory_space<vmem>>, vector<16x32xf32>,
    } else {
    }
    %c0 = arith.constant 0 : index
    %c0_1 = arith.constant 0 : index
    %3 = vector.load %arg22[%c0, %c0_1] : memref<24x32xf32, #tpu.memory_space<vmem>>, vector<24x32xf32>
    %c0_2 = arith.constant 0 : index
    %c0_3 = arith.constant 0 : index
    %c0_4 = arith.constant 0 : index
    %4 = vector.load %arg9[%c0_2, %c0_3, %c0_4] : memref<1x32x32xf32, #tpu.memory_space<vmem>>, vector<1x32x32xf32>
    %5 = vector.shape_cast %4 : vector<1x32x32xf32> to vector<32x32xf32>
    %cst = arith.constant dense<0.000000e+00> : vector<24x32xf32>
    %6 = tpu.matmul %3, %5, %cst {dimension_numbers = #tpu.dot_dimension_numbers<[1], [0], [0], [1], [0, 0, 1, 1], [], []>} : vector<24x32xf32>, vector<32x32xf32>, vector<24x32xf32> -> vector<24x32xf32>
    %c0_5 = arith.constant 0 : index
    %c0_6 = arith.constant 0 : index
    %c0_7 = arith.constant 0 : index
    %7 = vector.load %arg10[%c0_5, %c0_6, %c0_7] : memref<1x32x32xf32, #tpu.memory_space<vmem>>, vector<1x32x32xf32>
    %8 = vector.shape_cast %7 : vector<1x32x32xf32> to vector<32x32xf32>
    %cst_8 = arith.constant dense<0.000000e+00> : vector<24x32xf32>
    %9 = tpu.matmul %3, %8, %cst_8 {dimension_numbers = #tpu.dot_dimension_numbers<[1], [0], [0], [1], [0, 0, 1, 1], [], []>} : vector<24x32xf32>, vector<32x32xf32>, vector<24x32xf32> -> vector<24x32xf32>
    %c0_9 = arith.constant 0 : index
    %c0_10 = arith.constant 0 : index
    %10 = vector.load %arg7[%c0_9, %c0_10] : memref<16x8xf32, #tpu.memory_space<vmem>>, vector<16x8xf32>
    %11 = vector.extract_strided_slice %6 {offsets = [16, 0], sizes = [8, 32], strides = [1, 1]} : vector<24x32xf32> to vector<8x32xf32>
    %cst_11 = arith.constant dense<0.000000e+00> : vector<16x32xf32>
    %12 = tpu.matmul %10, %11, %cst_11 {dimension_numbers = #tpu.dot_dimension_numbers<[1], [0], [0], [1], [0, 0, 1, 1], [], []>} : vector<16x8xf32>, vector<8x32xf32>, vector<16x32xf32> -> vector<16x32xf32>
    %13 = vector.extract_strided_slice %9 {offsets = [0, 0], sizes = [16, 32], strides = [1, 1]} : vector<24x32xf32> to vector<16x32xf32>
    %14 = arith.addf %12, %13 : vector<16x32xf32>
    %c0_12 = arith.constant 0 : index
    %c0_13 = arith.constant 0 : index
    %c0_14 = arith.constant 0 : index
    %15 = vector.load %arg11[%c0_12, %c0_13, %c0_14] : memref<1x1x32xf32, #tpu.memory_space<vmem>>, vector<1x1x32xf32>
    %16 = vector.shape_cast %15 : vector<1x1x32xf32> to vector<1x32xf32>
    %17 = vector.broadcast %16 : vector<1x32xf32> to vector<16x32xf32>
    %18 = arith.addf %14, %17 : vector<16x32xf32>
    %cst_15 = arith.constant 0.000000e+00 : f32
    %19 = vector.broadcast %cst_15 : f32 to vector<16x32xf32>
    %20 = arith.maximumf %18, %19 : vector<16x32xf32>
    %c0_16 = arith.constant 0 : index
    %c0_17 = arith.constant 0 : index
    %21 = vector.load %arg8[%c0_16, %c0_17] : memref<8x16xf32, #tpu.memory_space<vmem>>, vector<8x16xf32>
    %22 = vector.extract_strided_slice %6 {offsets = [0, 0], sizes = [16, 32], strides = [1, 1]} : vector<24x32xf32> to vector<16x32xf32>
    %cst_18 = arith.constant dense<0.000000e+00> : vector<8x32xf32>
    %23 = tpu.matmul %21, %22, %cst_18 {dimension_numbers = #tpu.dot_dimension_numbers<[1], [0], [0], [1], [0, 0, 1, 1], [], []>} : vector<8x16xf32>, vector<16x32xf32>, vector<8x32xf32> -> vector<8x32xf32>
    %24 = vector.extract_strided_slice %9 {offsets = [16, 0], sizes = [8, 32], strides = [1, 1]} : vector<24x32xf32> to vector<8x32xf32>
    %25 = arith.addf %23, %24 : vector<8x32xf32>
    %c0_19 = arith.constant 0 : index
    %c0_20 = arith.constant 0 : index
    %c0_21 = arith.constant 0 : index
    %26 = vector.load %arg11[%c0_19, %c0_20, %c0_21] : memref<1x1x32xf32, #tpu.memory_space<vmem>>, vector<1x1x32xf32>
    %27 = vector.shape_cast %26 : vector<1x1x32xf32> to vector<1x32xf32>
    %28 = vector.broadcast %27 : vector<1x32xf32> to vector<8x32xf32>
    %29 = arith.addf %25, %28 : vector<8x32xf32>
    %cst_22 = arith.constant 0.000000e+00 : f32
    %30 = vector.broadcast %cst_22 : f32 to vector<8x32xf32>
    %31 = arith.maximumf %29, %30 : vector<8x32xf32>
    %c0_23 = arith.constant 0 : index
    %c0_24 = arith.constant 0 : index
    %32 = vector.load %arg22[%c0_23, %c0_24] : memref<24x32xf32, #tpu.memory_space<vmem>>, vector<16x32xf32>
    tpu.vector_store %arg22[%c0_23, %c0_24], %20 {strides = array<i32>} : memref<24x32xf32, #tpu.memory_space<vmem>>, vector<16x32xf32>,
    %c16 = arith.constant 16 : index
    %c0_25 = arith.constant 0 : index
    %33 = vector.load %arg22[%c16, %c0_25] : memref<24x32xf32, #tpu.memory_space<vmem>>, vector<8x32xf32>
    tpu.vector_store %arg22[%c16, %c0_25], %31 {strides = array<i32>} : memref<24x32xf32, #tpu.memory_space<vmem>>, vector<8x32xf32>,
    %c0_26 = arith.constant 0 : index
    %c0_27 = arith.constant 0 : index
    %34 = vector.load %arg23[%c0_26, %c0_27] : memref<16x32xf32, #tpu.memory_space<vmem>>, vector<16x32xf32>
    %c0_28 = arith.constant 0 : index
    %c0_29 = arith.constant 0 : index
    %c0_30 = arith.constant 0 : index
    %35 = vector.load %arg13[%c0_28, %c0_29, %c0_30] : memref<1x32x32xf32, #tpu.memory_space<vmem>>, vector<1x32x32xf32>
    %36 = vector.shape_cast %35 : vector<1x32x32xf32> to vector<32x32xf32>
    %cst_31 = arith.constant dense<0.000000e+00> : vector<16x32xf32>
    %37 = tpu.matmul %20, %36, %cst_31 {dimension_numbers = #tpu.dot_dimension_numbers<[1], [0], [0], [1], [0, 0, 1, 1], [], []>} : vector<16x32xf32>, vector<32x32xf32>, vector<16x32xf32> -> vector<16x32xf32>
    %38 = arith.addf %34, %37 : vector<16x32xf32>
    %c0_32 = arith.constant 0 : index
    %c0_33 = arith.constant 0 : index
    %39 = vector.load %arg23[%c0_32, %c0_33] : memref<16x32xf32, #tpu.memory_space<vmem>>, vector<16x32xf32>
    tpu.vector_store %arg23[%c0_32, %c0_33], %38 {strides = array<i32>} : memref<16x32xf32, #tpu.memory_space<vmem>>, vector<16x32xf32>,
    %c1_i32 = arith.constant 1 : i32
    %40 = arith.cmpi eq, %arg0, %c1_i32 : i32
    %41 = arith.extui %40 : i1 to i32
    %c0_i32_34 = arith.constant 0 : i32
    %42 = arith.cmpi ne, %41, %c0_i32_34 : i32
    scf.if %42 {
      %c0_35 = arith.constant 0 : index
      %c0_36 = arith.constant 0 : index
      %43 = vector.load %arg23[%c0_35, %c0_36] : memref<16x32xf32, #tpu.memory_space<vmem>>, vector<16x32xf32>
      %c0_37 = arith.constant 0 : index
      %c0_38 = arith.constant 0 : index
      %44 = vector.load %arg14[%c0_37, %c0_38] : memref<1x32xf32, #tpu.memory_space<vmem>>, vector<1x32xf32>
      %45 = vector.broadcast %44 : vector<1x32xf32> to vector<16x32xf32>
      %46 = arith.addf %43, %45 : vector<16x32xf32>
      %cst_39 = arith.constant 0.000000e+00 : f32
      %47 = vector.broadcast %cst_39 : f32 to vector<16x32xf32>
      %48 = arith.maximumf %46, %47 : vector<16x32xf32>
      %c0_40 = arith.constant 0 : index
      %c0_41 = arith.constant 0 : index
      %49 = vector.load %arg15[%c0_40, %c0_41] : memref<32x32xf32, #tpu.memory_space<vmem>>, vector<32x32xf32>
      %cst_42 = arith.constant dense<0.000000e+00> : vector<16x32xf32>
      %50 = tpu.matmul %48, %49, %cst_42 {dimension_numbers = #tpu.dot_dimension_numbers<[1], [0], [0], [1], [0, 0, 1, 1], [], []>} : vector<16x32xf32>, vector<32x32xf32>, vector<16x32xf32> -> vector<16x32xf32>
      %c0_43 = arith.constant 0 : index
      %c0_44 = arith.constant 0 : index
      %51 = vector.load %arg16[%c0_43, %c0_44] : memref<1x32xf32, #tpu.memory_space<vmem>>, vector<1x32xf32>
      %52 = vector.broadcast %51 : vector<1x32xf32> to vector<16x32xf32>
      %53 = arith.addf %50, %52 : vector<16x32xf32>
      %cst_45 = arith.constant 0.000000e+00 : f32
      %54 = vector.broadcast %cst_45 : f32 to vector<16x32xf32>
      %55 = arith.maximumf %53, %54 : vector<16x32xf32>
      %c0_46 = arith.constant 0 : index
      %c0_47 = arith.constant 0 : index
      %56 = vector.load %arg17[%c0_46, %c0_47] : memref<32x32xf32, #tpu.memory_space<vmem>>, vector<32x32xf32>
      %cst_48 = arith.constant dense<0.000000e+00> : vector<16x32xf32>
      %57 = tpu.matmul %55, %56, %cst_48 {dimension_numbers = #tpu.dot_dimension_numbers<[1], [0], [0], [1], [0, 0, 1, 1], [], []>} : vector<16x32xf32>, vector<32x32xf32>, vector<16x32xf32> -> vector<16x32xf32>
      %c0_49 = arith.constant 0 : index
      %c0_50 = arith.constant 0 : index
      %58 = vector.load %arg18[%c0_49, %c0_50] : memref<1x32xf32, #tpu.memory_space<vmem>>, vector<1x32xf32>
      %59 = vector.broadcast %58 : vector<1x32xf32> to vector<16x32xf32>
      %60 = arith.addf %57, %59 : vector<16x32xf32>
      %cst_51 = arith.constant 0.000000e+00 : f32
      %61 = vector.broadcast %cst_51 : f32 to vector<16x32xf32>
      %62 = arith.maximumf %60, %61 : vector<16x32xf32>
      %c0_52 = arith.constant 0 : index
      %c0_53 = arith.constant 0 : index
      %63 = vector.load %arg19[%c0_52, %c0_53] : memref<32x4xf32, #tpu.memory_space<vmem>>, vector<32x4xf32>
      %cst_54 = arith.constant dense<0.000000e+00> : vector<16x4xf32>
      %64 = tpu.matmul %62, %63, %cst_54 {dimension_numbers = #tpu.dot_dimension_numbers<[1], [0], [0], [1], [0, 0, 1, 1], [], []>} : vector<16x32xf32>, vector<32x4xf32>, vector<16x4xf32> -> vector<16x4xf32>
      %c0_55 = arith.constant 0 : index
      %c0_56 = arith.constant 0 : index
      %65 = vector.load %arg20[%c0_55, %c0_56] : memref<1x4xf32, #tpu.memory_space<vmem>>, vector<1x4xf32>
      %66 = vector.broadcast %65 : vector<1x4xf32> to vector<16x4xf32>
      %67 = arith.addf %64, %66 : vector<16x4xf32>
      %cst_57 = arith.constant 0.000000e+00 : f32
      %68 = vector.broadcast %cst_57 : f32 to vector<16x4xf32>
      %69 = arith.maximumf %67, %68 : vector<16x4xf32>
      %70 = tpu.concatenate %62, %69 in 1 : vector<16x32xf32>, vector<16x4xf32> -> vector<16x36xf32>
      %c0_58 = arith.constant 0 : index
      %c0_59 = arith.constant 0 : index
      %71 = vector.load %arg21[%c0_58, %c0_59] : memref<16x36xf32, #tpu.memory_space<vmem>>, vector<16x36xf32>
      tpu.vector_store %arg21[%c0_58, %c0_59], %70 {strides = array<i32>} : memref<16x36xf32, #tpu.memory_space<vmem>>, vector<16x36xf32>,
    } else {
    }
    return
  }
  func.func @transform_0(%arg0: i32) -> (i32, i32) {
    %c0_i32 = arith.constant 0 : i32
    %c0_i32_0 = arith.constant 0 : i32
    %c0_i32_1 = arith.constant 0 : i32
    return %c0_i32, %c0_i32_0 : i32, i32
  }
  func.func @transform_1(%arg0: i32) -> (i32, i32) {
    %c0_i32 = arith.constant 0 : i32
    %c0_i32_0 = arith.constant 0 : i32
    %c0_i32_1 = arith.constant 0 : i32
    return %c0_i32, %c0_i32_0 : i32, i32
  }
  func.func @transform_2(%arg0: i32) -> (i32, i32) {
    %c0_i32 = arith.constant 0 : i32
    %c0_i32_0 = arith.constant 0 : i32
    %c0_i32_1 = arith.constant 0 : i32
    return %c0_i32, %c0_i32_0 : i32, i32
  }
  func.func @transform_3(%arg0: i32) -> (i32, i32) {
    %c0_i32 = arith.constant 0 : i32
    %c0_i32_0 = arith.constant 0 : i32
    %c0_i32_1 = arith.constant 0 : i32
    return %c0_i32, %c0_i32_0 : i32, i32
  }
  func.func @transform_4(%arg0: i32) -> (i32, i32) {
    %c0_i32 = arith.constant 0 : i32
    %c0_i32_0 = arith.constant 0 : i32
    %c0_i32_1 = arith.constant 0 : i32
    return %c0_i32, %c0_i32_0 : i32, i32
  }
  func.func @transform_5(%arg0: i32) -> (i32, i32) {
    %c0_i32 = arith.constant 0 : i32
    %c0_i32_0 = arith.constant 0 : i32
    %c0_i32_1 = arith.constant 0 : i32
    return %c0_i32, %c0_i32_0 : i32, i32
  }
  func.func @transform_6(%arg0: i32) -> (i32, i32) {
    %c0_i32 = arith.constant 0 : i32
    %c0_i32_0 = arith.constant 0 : i32
    %c0_i32_1 = arith.constant 0 : i32
    return %c0_i32, %c0_i32_0 : i32, i32
  }
  func.func @transform_7(%arg0: i32) -> (i32, i32) {
    %c0_i32 = arith.constant 0 : i32
    %c0_i32_0 = arith.constant 0 : i32
    %c0_i32_1 = arith.constant 0 : i32
    return %c0_i32, %c0_i32_0 : i32, i32
  }
  func.func @transform_8(%arg0: i32) -> (i32, i32, i32) {
    %c0_i32 = arith.constant 0 : i32
    %c0_i32_0 = arith.constant 0 : i32
    %c0_i32_1 = arith.constant 0 : i32
    return %arg0, %c0_i32, %c0_i32_0 : i32, i32, i32
  }
  func.func @transform_9(%arg0: i32) -> (i32, i32, i32) {
    %c0_i32 = arith.constant 0 : i32
    %c0_i32_0 = arith.constant 0 : i32
    %c0_i32_1 = arith.constant 0 : i32
    return %arg0, %c0_i32, %c0_i32_0 : i32, i32, i32
  }
  func.func @transform_10(%arg0: i32) -> (i32, i32, i32) {
    %c0_i32 = arith.constant 0 : i32
    %c0_i32_0 = arith.constant 0 : i32
    %c0_i32_1 = arith.constant 0 : i32
    return %arg0, %c0_i32, %c0_i32_0 : i32, i32, i32
  }
  func.func @transform_11(%arg0: i32) -> (i32, i32) {
    %c0_i32 = arith.constant 0 : i32
    %c0_i32_0 = arith.constant 0 : i32
    %c0_i32_1 = arith.constant 0 : i32
    return %c0_i32, %c0_i32_0 : i32, i32
  }
  func.func @transform_12(%arg0: i32) -> (i32, i32, i32) {
    %c0_i32 = arith.constant 0 : i32
    %c0_i32_0 = arith.constant 0 : i32
    %c0_i32_1 = arith.constant 0 : i32
    return %arg0, %c0_i32, %c0_i32_0 : i32, i32, i32
  }
  func.func @transform_13(%arg0: i32) -> (i32, i32) {
    %c0_i32 = arith.constant 0 : i32
    %c0_i32_0 = arith.constant 0 : i32
    %c0_i32_1 = arith.constant 0 : i32
    return %c0_i32, %c0_i32_0 : i32, i32
  }
  func.func @transform_14(%arg0: i32) -> (i32, i32) {
    %c0_i32 = arith.constant 0 : i32
    %c0_i32_0 = arith.constant 0 : i32
    %c0_i32_1 = arith.constant 0 : i32
    return %c0_i32, %c0_i32_0 : i32, i32
  }
  func.func @transform_15(%arg0: i32) -> (i32, i32) {
    %c0_i32 = arith.constant 0 : i32
    %c0_i32_0 = arith.constant 0 : i32
    %c0_i32_1 = arith.constant 0 : i32
    return %c0_i32, %c0_i32_0 : i32, i32
  }
  func.func @transform_16(%arg0: i32) -> (i32, i32) {
    %c0_i32 = arith.constant 0 : i32
    %c0_i32_0 = arith.constant 0 : i32
    %c0_i32_1 = arith.constant 0 : i32
    return %c0_i32, %c0_i32_0 : i32, i32
  }
  func.func @transform_17(%arg0: i32) -> (i32, i32) {
    %c0_i32 = arith.constant 0 : i32
    %c0_i32_0 = arith.constant 0 : i32
    %c0_i32_1 = arith.constant 0 : i32
    return %c0_i32, %c0_i32_0 : i32, i32
  }
  func.func @transform_18(%arg0: i32) -> (i32, i32) {
    %c0_i32 = arith.constant 0 : i32
    %c0_i32_0 = arith.constant 0 : i32
    %c0_i32_1 = arith.constant 0 : i32
    return %c0_i32, %c0_i32_0 : i32, i32
  }
  func.func @transform_19(%arg0: i32) -> (i32, i32) {
    %c0_i32 = arith.constant 0 : i32
    %c0_i32_0 = arith.constant 0 : i32
    %c0_i32_1 = arith.constant 0 : i32
    return %c0_i32, %c0_i32_0 : i32, i32
  }
  func.func @transform_20(%arg0: i32) -> (i32, i32) {
    %c0_i32 = arith.constant 0 : i32
    %c0_i32_0 = arith.constant 0 : i32
    %c0_i32_1 = arith.constant 0 : i32
    return %c0_i32, %c0_i32_0 : i32, i32
  }
}

</mosaic_0001>

<llo_original>
// kernel: tpu_custom_call.1
$region0: #{tpu_custom_call.1}
  #allocation0 [shape = 'u32[]', space=smem, size = 0x4, offset = 0x4, fixed_abs, tag = 'smem constant byte address 0x4 - core index']
  #allocation1 [shape = 'u32[144,128]{1,0:T(1,128)}', space=vmem, size = 0x12000, scoped, tag = 'internal scratch']
  #allocation2 [shape = 'f32[24,32]{1,0:T(8,128)}', space=vmem, size = 0x3000, scoped, tag = 'scratch operand']
  #allocation3 [shape = 'f32[16,32]{1,0:T(8,128)}', space=vmem, size = 0x2000, scoped, tag = 'scratch operand']
  %s0 = inlined_call_operand.hbm [shape: f32[16,12], index: 0, kind: input, shape index: {}]
  %s1 = inlined_call_operand.hbm [shape: f32[12,32], index: 1, kind: input, shape index: {}]
  %s2 = inlined_call_operand.vmem [shape: f32[1,32], index: 2, kind: input, shape index: {}]
  %s3 = inlined_call_operand.hbm [shape: f32[8,10], index: 3, kind: input, shape index: {}]
  %s4 = inlined_call_operand.hbm [shape: f32[10,32], index: 4, kind: input, shape index: {}]
  %s5 = inlined_call_operand.hbm [shape: f32[1,32], index: 5, kind: input, shape index: {}]
  %s6 = inlined_call_operand.vmem [shape: f32[16,8], index: 6, kind: input, shape index: {}]
  %s7 = inlined_call_operand.hbm [shape: f32[8,16], index: 7, kind: input, shape index: {}]
  %s8 = inlined_call_operand.vmem [shape: f32[2,32,32], index: 8, kind: input, shape index: {}]
  %s9 = inlined_call_operand.hbm [shape: f32[2,32,32], index: 9, kind: input, shape index: {}]
  %s10 = inlined_call_operand.hbm [shape: f32[2,1,32], index: 10, kind: input, shape index: {}]
  %s11 = inlined_call_operand.vmem [shape: f32[32,32], index: 11, kind: input, shape index: {}]
  %s12 = inlined_call_operand.hbm [shape: f32[2,32,32], index: 12, kind: input, shape index: {}]
  %s13 = inlined_call_operand.vmem [shape: f32[1,32], index: 13, kind: input, shape index: {}]
  %s14 = inlined_call_operand.hbm [shape: f32[32,32], index: 14, kind: input, shape index: {}]
  %s15 = inlined_call_operand.vmem [shape: f32[1,32], index: 15, kind: input, shape index: {}]
  %s16 = inlined_call_operand.hbm [shape: f32[32,32], index: 16, kind: input, shape index: {}]
  %s17 = inlined_call_operand.vmem [shape: f32[1,32], index: 17, kind: input, shape index: {}]
  %s18 = inlined_call_operand.vmem [shape: f32[32,4], index: 18, kind: input, shape index: {}]
  %s19 = inlined_call_operand.vmem [shape: f32[1,4], index: 19, kind: input, shape index: {}]
  %s20 = inlined_call_operand.hbm [shape: f32[16,36], index: 20, kind: output, shape index: {}]
  %s21 = sld [smem:[#allocation0]]
  $region165: #{tpu_custom_call.1} parent=0
    _
  %s23 = ssub.s32 1, %s21
  %s24 = scalar_select 0, %s23, %s21
  $region1: #{tpu_custom_call.1} parent=0
    #allocation4 [shape = 'u8[8192]{0}', space=vmem, size = 0x2000, scoped, tag = 'input window, operand 0, single buffered']
    #allocation5 [shape = 's32[2]{0}', space=sflag, size = 0x8, scoped, tag = 'scoped memory for tpu_custom_call.1']
    #allocation6 [shape = 's32[2]{0}', space=sflag, size = 0x8, scoped, tag = 'scoped memory for tpu_custom_call.1']
    #allocation7 [shape = 'u8[8192]{0}', space=vmem, size = 0x2000, scoped, tag = 'input window, operand 1, single buffered']
    #allocation8 [shape = 's32[1]{0}', space=sflag, size = 0x4, scoped, tag = 'scoped memory for tpu_custom_call.1']
    #allocation9 [shape = 'u8[4096]{0}', space=vmem, size = 0x1000, scoped, tag = 'input window, operand 3, single buffered']
    #allocation10 [shape = 'u8[8192]{0}', space=vmem, size = 0x2000, scoped, tag = 'input window, operand 4, single buffered']
    #allocation11 [shape = 's32[1]{0}', space=sflag, size = 0x4, scoped, tag = 'scoped memory for tpu_custom_call.1']
    #allocation12 [shape = 'u8[512]{0}', space=vmem, size = 0x400, scoped, tag = 'input window, operand 5, single buffered']
    #allocation13 [shape = 'u8[4096]{0}', space=vmem, size = 0x1000, scoped, tag = 'input window, operand 7, single buffered']
    #allocation14 [shape = 's32[1]{0}', space=sflag, size = 0x4, scoped, tag = 'scoped memory for tpu_custom_call.1']
    #allocation15 [shape = 'u8[32768]{0}', space=vmem, size = 0x8000, scoped, tag = 'input window, operand 9']
    #allocation16 [shape = 'u8[1024]{0}', space=vmem, size = 0x400, scoped, tag = 'input window, operand 10']
    #allocation17 [shape = 'u8[32768]{0}', space=vmem, size = 0x8000, scoped, tag = 'input window, operand 12']
    #allocation18 [shape = 'u8[16384]{0}', space=vmem, size = 0x4000, scoped, tag = 'input window, operand 14, single buffered']
    #allocation19 [shape = 'u8[16384]{0}', space=vmem, size = 0x4000, scoped, tag = 'input window, operand 16, single buffered']
    #allocation20 [shape = 'u8[8192]{0}', space=vmem, size = 0x2000, scoped, tag = 'output window, operand 0, single buffered']
    %25 = vsyncpa [#allocation5], 0
    %26 = vsyncpa [#allocation8], 0
    %27 = vsyncpa [#allocation11], 0
    %28 = vsyncpa [#allocation14], 0
    %29 = vsyncpa [#allocation6], 0
    loop: start=0, step=1, limit=4
    $region2: #{tpu_custom_call.1} parent=1 // loop_pre_header
      _
    $region3: #{tpu_custom_call.1} parent=1 // loop_header
      %s31 = sphi 0, %s35
      %p32 = scmp.ge.s32.totalorder %s31, 4
      %s39 = sphi 0, %s39
      %s41 = sphi 0, %s39
      %s42 = sphi 0, %s41
      %s56 = sphi 0, %s42
      %s60 = sphi 0, %s60
      %s62 = sphi 0, %s60
      %s63 = sphi 0, %s62
      %s77 = sphi 0, %s63
      %s81 = sphi 0, %s81
      %s83 = sphi 0, %s81
      %s84 = sphi 0, %s83
      %s98 = sphi 0, %s84
      %s102 = sphi 0, %s102
      %s104 = sphi 0, %s102
      %s105 = sphi 0, %s104
      %s119 = sphi 0, %s105
      %s123 = sphi 0, %s123
      %s125 = sphi 0, %s123
      %s126 = sphi 0, %s125
      %s140 = sphi 0, %s126
      %s144 = sphi 0, %s144
      %s146 = sphi 0, %s144
      %s147 = sphi 0, %s146
      %s161 = sphi 0, %s147
      %s165 = sphi 0, %s165
      %s167 = sphi 0, %s165
      %s168 = sphi 0, %s167
      %s182 = sphi 0, %s168
      %s186 = sphi 0, %s186
      %s188 = sphi 0, %s186
      %s189 = sphi 0, %s188
      %s203 = sphi 0, %s189
      %s209 = sphi 0, %s211
      %s212 = sphi 0, %s209
      %s213 = sphi 0, %s212
      %s229 = sphi 0, %s213
      %s235 = sphi 0, %s237
      %s238 = sphi 0, %s235
      %s239 = sphi 0, %s238
      %s255 = sphi 0, %s239
      %s261 = sphi 0, %s263
      %s264 = sphi 0, %s261
      %s265 = sphi 0, %s264
      %s281 = sphi 0, %s265
      %s285 = sphi 0, %s285
      %s287 = sphi 0, %s285
      %s288 = sphi 0, %s287
      %s302 = sphi 0, %s288
      %s308 = sphi 0, %s310
      %s311 = sphi 0, %s308
      %s312 = sphi 0, %s311
      %s328 = sphi 0, %s312
      %s332 = sphi 0, %s332
      %s334 = sphi 0, %s332
      %s335 = sphi 0, %s334
      %s349 = sphi 0, %s335
      %s353 = sphi 0, %s353
      %s355 = sphi 0, %s353
      %s356 = sphi 0, %s355
      %s370 = sphi 0, %s356
      %s374 = sphi 0, %s374
      %s376 = sphi 0, %s374
      %s377 = sphi 0, %s376
      %s391 = sphi 0, %s377
      %s395 = sphi 0, %s395
      %s397 = sphi 0, %s395
      %s398 = sphi 0, %s397
      %s412 = sphi 0, %s398
      %s416 = sphi 0, %s416
      %s418 = sphi 0, %s416
      %s419 = sphi 0, %s418
      %s433 = sphi 0, %s419
      %s437 = sphi 0, %s437
      %s439 = sphi 0, %s437
      %s440 = sphi 0, %s439
      %s454 = sphi 0, %s440
      %s458 = sphi 0, %s458
      %s460 = sphi 0, %s458
      %s461 = sphi 0, %s460
      %s475 = sphi 0, %s461
      %s479 = sphi 0, %s479
      %s481 = sphi 0, %s479
      %s482 = sphi 0, %s481
      %s496 = sphi 0, %s482
    $region4: #{tpu_custom_call.1} parent=1 // loop_header_branch
      %34 = sbr.rel (%p32) target = $region8
    $region5: #{tpu_custom_call.1} parent=1 // loop_body
      %s36 = ssub.s32 %s31, 1
      %s37 = ssub.s32 %s31, 2
      %s38 = sadd.s32 %s31, 1
      %s40 = sadd.s32 %s39, 1
      %p43 = scmp.eq.s32.totalorder %s31, 1
      %p44 = scmp.ne.s32.totalorder %s39, %s41
      %p45 = scmp.eq.s32.totalorder %s31, 0
      %p46 = por %p44, %p45
      %p47 = scmp.ne.s32.totalorder %s39, %s41
      %p48 = scmp.eq.s32.totalorder %s36, 1
      %p49 = por %p47, %p48
      %p50 = scmp.ne.s32.totalorder %s41, %s42
      %p51 = scmp.eq.s32.totalorder %s36, 0
      %p52 = por %p50, %p51
      %p53 = scmp.ne.s32.totalorder %s41, %s42
      %p54 = scmp.eq.s32.totalorder %s37, 1
      %p55 = por %p53, %p54
      %p57 = scmp.ne.s32.totalorder %s42, %s56
      %p58 = scmp.eq.s32.totalorder %s37, 0
      %p59 = por %p57, %p58
      %s61 = sadd.s32 %s60, 1
      %p64 = scmp.eq.s32.totalorder %s31, 1
      %p65 = scmp.ne.s32.totalorder %s60, %s62
      %p66 = scmp.eq.s32.totalorder %s31, 0
      %p67 = por %p65, %p66
      %p68 = scmp.ne.s32.totalorder %s60, %s62
      %p69 = scmp.eq.s32.totalorder %s36, 1
      %p70 = por %p68, %p69
      %p71 = scmp.ne.s32.totalorder %s62, %s63
      %p72 = scmp.eq.s32.totalorder %s36, 0
      %p73 = por %p71, %p72
      %p74 = scmp.ne.s32.totalorder %s62, %s63
      %p75 = scmp.eq.s32.totalorder %s37, 1
      %p76 = por %p74, %p75
      %p78 = scmp.ne.s32.totalorder %s63, %s77
      %p79 = scmp.eq.s32.totalorder %s37, 0
      %p80 = por %p78, %p79
      %s82 = sadd.s32 %s81, 1
      %p85 = scmp.eq.s32.totalorder %s31, 1
      %p86 = scmp.ne.s32.totalorder %s81, %s83
      %p87 = scmp.eq.s32.totalorder %s31, 0
      %p88 = por %p86, %p87
      %p89 = scmp.ne.s32.totalorder %s81, %s83
      %p90 = scmp.eq.s32.totalorder %s36, 1
      %p91 = por %p89, %p90
      %p92 = scmp.ne.s32.totalorder %s83, %s84
      %p93 = scmp.eq.s32.totalorder %s36, 0
      %p94 = por %p92, %p93
      %p95 = scmp.ne.s32.totalorder %s83, %s84
      %p96 = scmp.eq.s32.totalorder %s37, 1
      %p97 = por %p95, %p96
      %p99 = scmp.ne.s32.totalorder %s84, %s98
      %p100 = scmp.eq.s32.totalorder %s37, 0
      %p101 = por %p99, %p100
      %s103 = sadd.s32 %s102, 1
      %p106 = scmp.eq.s32.totalorder %s31, 1
      %p107 = scmp.ne.s32.totalorder %s102, %s104
      %p108 = scmp.eq.s32.totalorder %s31, 0
      %p109 = por %p107, %p108
      %p110 = scmp.ne.s32.totalorder %s102, %s104
      %p111 = scmp.eq.s32.totalorder %s36, 1
      %p112 = por %p110, %p111
      %p113 = scmp.ne.s32.totalorder %s104, %s105
      %p114 = scmp.eq.s32.totalorder %s36, 0
      %p115 = por %p113, %p114
      %p116 = scmp.ne.s32.totalorder %s104, %s105
      %p117 = scmp.eq.s32.totalorder %s37, 1
      %p118 = por %p116, %p117
      %p120 = scmp.ne.s32.totalorder %s105, %s119
      %p121 = scmp.eq.s32.totalorder %s37, 0
      %p122 = por %p120, %p121
      %s124 = sadd.s32 %s123, 1
      %p127 = scmp.eq.s32.totalorder %s31, 1
      %p128 = scmp.ne.s32.totalorder %s123, %s125
      %p129 = scmp.eq.s32.totalorder %s31, 0
      %p130 = por %p128, %p129
      %p131 = scmp.ne.s32.totalorder %s123, %s125
      %p132 = scmp.eq.s32.totalorder %s36, 1
      %p133 = por %p131, %p132
      %p134 = scmp.ne.s32.totalorder %s125, %s126
      %p135 = scmp.eq.s32.totalorder %s36, 0
      %p136 = por %p134, %p135
      %p137 = scmp.ne.s32.totalorder %s125, %s126
      %p138 = scmp.eq.s32.totalorder %s37, 1
      %p139 = por %p137, %p138
      %p141 = scmp.ne.s32.totalorder %s126, %s140
      %p142 = scmp.eq.s32.totalorder %s37, 0
      %p143 = por %p141, %p142
      %s145 = sadd.s32 %s144, 1
      %p148 = scmp.eq.s32.totalorder %s31, 1
      %p149 = scmp.ne.s32.totalorder %s144, %s146
      %p150 = scmp.eq.s32.totalorder %s31, 0
      %p151 = por %p149, %p150
      %p152 = scmp.ne.s32.totalorder %s144, %s146
      %p153 = scmp.eq.s32.totalorder %s36, 1
      %p154 = por %p152, %p153
      %p155 = scmp.ne.s32.totalorder %s146, %s147
      %p156 = scmp.eq.s32.totalorder %s36, 0
      %p157 = por %p155, %p156
      %p158 = scmp.ne.s32.totalorder %s146, %s147
      %p159 = scmp.eq.s32.totalorder %s37, 1
      %p160 = por %p158, %p159
      %p162 = scmp.ne.s32.totalorder %s147, %s161
      %p163 = scmp.eq.s32.totalorder %s37, 0
      %p164 = por %p162, %p163
      %s166 = sadd.s32 %s165, 1
      %p169 = scmp.eq.s32.totalorder %s31, 1
      %p170 = scmp.ne.s32.totalorder %s165, %s167
      %p171 = scmp.eq.s32.totalorder %s31, 0
      %p172 = por %p170, %p171
      %p173 = scmp.ne.s32.totalorder %s165, %s167
      %p174 = scmp.eq.s32.totalorder %s36, 1
      %p175 = por %p173, %p174
      %p176 = scmp.ne.s32.totalorder %s167, %s168
      %p177 = scmp.eq.s32.totalorder %s36, 0
      %p178 = por %p176, %p177
      %p179 = scmp.ne.s32.totalorder %s167, %s168
      %p180 = scmp.eq.s32.totalorder %s37, 1
      %p181 = por %p179, %p180
      %p183 = scmp.ne.s32.totalorder %s168, %s182
      %p184 = scmp.eq.s32.totalorder %s37, 0
      %p185 = por %p183, %p184
      %s187 = sadd.s32 %s186, 1
      %p190 = scmp.eq.s32.totalorder %s31, 1
      %p191 = scmp.ne.s32.totalorder %s186, %s188
      %p192 = scmp.eq.s32.totalorder %s31, 0
      %p193 = por %p191, %p192
      %p194 = scmp.ne.s32.totalorder %s186, %s188
      %p195 = scmp.eq.s32.totalorder %s36, 1
      %p196 = por %p194, %p195
      %p197 = scmp.ne.s32.totalorder %s188, %s189
      %p198 = scmp.eq.s32.totalorder %s36, 0
      %p199 = por %p197, %p198
      %p200 = scmp.ne.s32.totalorder %s188, %s189
      %p201 = scmp.eq.s32.totalorder %s37, 1
      %p202 = por %p200, %p201
      %p204 = scmp.ne.s32.totalorder %s189, %s203
      %p205 = scmp.eq.s32.totalorder %s37, 0
      %p206 = por %p204, %p205
      %s207 = ssub.s32 %s31, %s38
      %p208 = scmp.eq.s32.totalorder %s207, 0
      %s210 = sadd.s32 %s209, 1
      %s211 = scalar_select %p208, %s209, %s210
      %p214 = pneg %p208
      %p215 = scmp.eq.s32.totalorder %s31, 1
      %p216 = por %p214, %p215
      %p217 = scmp.ne.s32.totalorder %s209, %s212
      %p218 = scmp.eq.s32.totalorder %s31, 0
      %p219 = por %p217, %p218
      %p220 = scmp.ne.s32.totalorder %s209, %s212
      %p221 = scmp.eq.s32.totalorder %s36, 1
      %p222 = por %p220, %p221
      %p223 = scmp.ne.s32.totalorder %s212, %s213
      %p224 = scmp.eq.s32.totalorder %s36, 0
      %p225 = por %p223, %p224
      %p226 = scmp.ne.s32.totalorder %s212, %s213
      %p227 = scmp.eq.s32.totalorder %s37, 1
      %p228 = por %p226, %p227
      %p230 = scmp.ne.s32.totalorder %s213, %s229
      %p231 = scmp.eq.s32.totalorder %s37, 0
      %p232 = por %p230, %p231
      %s233 = ssub.s32 %s31, %s38
      %p234 = scmp.eq.s32.totalorder %s233, 0
      %s236 = sadd.s32 %s235, 1
      %s237 = scalar_select %p234, %s235, %s236
      %p240 = pneg %p234
      %p241 = scmp.eq.s32.totalorder %s31, 1
      %p242 = por %p240, %p241
      %p243 = scmp.ne.s32.totalorder %s235, %s238
      %p244 = scmp.eq.s32.totalorder %s31, 0
      %p245 = por %p243, %p244
      %p246 = scmp.ne.s32.totalorder %s235, %s238
      %p247 = scmp.eq.s32.totalorder %s36, 1
      %p248 = por %p246, %p247
      %p249 = scmp.ne.s32.totalorder %s238, %s239
      %p250 = scmp.eq.s32.totalorder %s36, 0
      %p251 = por %p249, %p250
      %p252 = scmp.ne.s32.totalorder %s238, %s239
      %p253 = scmp.eq.s32.totalorder %s37, 1
      %p254 = por %p252, %p253
      %p256 = scmp.ne.s32.totalorder %s239, %s255
      %p257 = scmp.eq.s32.totalorder %s37, 0
      %p258 = por %p256, %p257
      %s259 = ssub.s32 %s31, %s38
      %p260 = scmp.eq.s32.totalorder %s259, 0
      %s262 = sadd.s32 %s261, 1
      %s263 = scalar_select %p260, %s261, %s262
      %p266 = pneg %p260
      %p267 = scmp.eq.s32.totalorder %s31, 1
      %p268 = por %p266, %p267
      %p269 = scmp.ne.s32.totalorder %s261, %s264
      %p270 = scmp.eq.s32.totalorder %s31, 0
      %p271 = por %p269, %p270
      %p272 = scmp.ne.s32.totalorder %s261, %s264
      %p273 = scmp.eq.s32.totalorder %s36, 1
      %p274 = por %p272, %p273
      %p275 = scmp.ne.s32.totalorder %s264, %s265
      %p276 = scmp.eq.s32.totalorder %s36, 0
      %p277 = por %p275, %p276
      %p278 = scmp.ne.s32.totalorder %s264, %s265
      %p279 = scmp.eq.s32.totalorder %s37, 1
      %p280 = por %p278, %p279
      %p282 = scmp.ne.s32.totalorder %s265, %s281
      %p283 = scmp.eq.s32.totalorder %s37, 0
      %p284 = por %p282, %p283
      %s286 = sadd.s32 %s285, 1
      %p289 = scmp.eq.s32.totalorder %s31, 1
      %p290 = scmp.ne.s32.totalorder %s285, %s287
      %p291 = scmp.eq.s32.totalorder %s31, 0
      %p292 = por %p290, %p291
      %p293 = scmp.ne.s32.totalorder %s285, %s287
      %p294 = scmp.eq.s32.totalorder %s36, 1
      %p295 = por %p293, %p294
      %p296 = scmp.ne.s32.totalorder %s287, %s288
      %p297 = scmp.eq.s32.totalorder %s36, 0
      %p298 = por %p296, %p297
      %p299 = scmp.ne.s32.totalorder %s287, %s288
      %p300 = scmp.eq.s32.totalorder %s37, 1
      %p301 = por %p299, %p300
      %p303 = scmp.ne.s32.totalorder %s288, %s302
      %p304 = scmp.eq.s32.totalorder %s37, 0
      %p305 = por %p303, %p304
      %s306 = ssub.s32 %s31, %s38
      %p307 = scmp.eq.s32.totalorder %s306, 0
      %s309 = sadd.s32 %s308, 1
      %s310 = scalar_select %p307, %s308, %s309
      %p313 = pneg %p307
      %p314 = scmp.eq.s32.totalorder %s31, 1
      %p315 = por %p313, %p314
      %p316 = scmp.ne.s32.totalorder %s308, %s311
      %p317 = scmp.eq.s32.totalorder %s31, 0
      %p318 = por %p316, %p317
      %p319 = scmp.ne.s32.totalorder %s308, %s311
      %p320 = scmp.eq.s32.totalorder %s36, 1
      %p321 = por %p319, %p320
      %p322 = scmp.ne.s32.totalorder %s311, %s312
      %p323 = scmp.eq.s32.totalorder %s36, 0
      %p324 = por %p322, %p323
      %p325 = scmp.ne.s32.totalorder %s311, %s312
      %p326 = scmp.eq.s32.totalorder %s37, 1
      %p327 = por %p325, %p326
      %p329 = scmp.ne.s32.totalorder %s312, %s328
      %p330 = scmp.eq.s32.totalorder %s37, 0
      %p331 = por %p329, %p330
      %s333 = sadd.s32 %s332, 1
      %p336 = scmp.eq.s32.totalorder %s31, 1
      %p337 = scmp.ne.s32.totalorder %s332, %s334
      %p338 = scmp.eq.s32.totalorder %s31, 0
      %p339 = por %p337, %p338
      %p340 = scmp.ne.s32.totalorder %s332, %s334
      %p341 = scmp.eq.s32.totalorder %s36, 1
      %p342 = por %p340, %p341
      %p343 = scmp.ne.s32.totalorder %s334, %s335
      %p344 = scmp.eq.s32.totalorder %s36, 0
      %p345 = por %p343, %p344
      %p346 = scmp.ne.s32.totalorder %s334, %s335
      %p347 = scmp.eq.s32.totalorder %s37, 1
      %p348 = por %p346, %p347
      %p350 = scmp.ne.s32.totalorder %s335, %s349
      %p351 = scmp.eq.s32.totalorder %s37, 0
      %p352 = por %p350, %p351
      %s354 = sadd.s32 %s353, 1
      %p357 = scmp.eq.s32.totalorder %s31, 1
      %p358 = scmp.ne.s32.totalorder %s353, %s355
      %p359 = scmp.eq.s32.totalorder %s31, 0
      %p360 = por %p358, %p359
      %p361 = scmp.ne.s32.totalorder %s353, %s355
      %p362 = scmp.eq.s32.totalorder %s36, 1
      %p363 = por %p361, %p362
      %p364 = scmp.ne.s32.totalorder %s355, %s356
      %p365 = scmp.eq.s32.totalorder %s36, 0
      %p366 = por %p364, %p365
      %p367 = scmp.ne.s32.totalorder %s355, %s356
      %p368 = scmp.eq.s32.totalorder %s37, 1
      %p369 = por %p367, %p368
      %p371 = scmp.ne.s32.totalorder %s356, %s370
      %p372 = scmp.eq.s32.totalorder %s37, 0
      %p373 = por %p371, %p372
      %s375 = sadd.s32 %s374, 1
      %p378 = scmp.eq.s32.totalorder %s31, 1
      %p379 = scmp.ne.s32.totalorder %s374, %s376
      %p380 = scmp.eq.s32.totalorder %s31, 0
      %p381 = por %p379, %p380
      %p382 = scmp.ne.s32.totalorder %s374, %s376
      %p383 = scmp.eq.s32.totalorder %s36, 1
      %p384 = por %p382, %p383
      %p385 = scmp.ne.s32.totalorder %s376, %s377
      %p386 = scmp.eq.s32.totalorder %s36, 0
      %p387 = por %p385, %p386
      %p388 = scmp.ne.s32.totalorder %s376, %s377
      %p389 = scmp.eq.s32.totalorder %s37, 1
      %p390 = por %p388, %p389
      %p392 = scmp.ne.s32.totalorder %s377, %s391
      %p393 = scmp.eq.s32.totalorder %s37, 0
      %p394 = por %p392, %p393
      %s396 = sadd.s32 %s395, 1
      %p399 = scmp.eq.s32.totalorder %s31, 1
      %p400 = scmp.ne.s32.totalorder %s395, %s397
      %p401 = scmp.eq.s32.totalorder %s31, 0
      %p402 = por %p400, %p401
      %p403 = scmp.ne.s32.totalorder %s395, %s397
      %p404 = scmp.eq.s32.totalorder %s36, 1
      %p405 = por %p403, %p404
      %p406 = scmp.ne.s32.totalorder %s397, %s398
      %p407 = scmp.eq.s32.totalorder %s36, 0
      %p408 = por %p406, %p407
      %p409 = scmp.ne.s32.totalorder %s397, %s398
      %p410 = scmp.eq.s32.totalorder %s37, 1
      %p411 = por %p409, %p410
      %p413 = scmp.ne.s32.totalorder %s398, %s412
      %p414 = scmp.eq.s32.totalorder %s37, 0
      %p415 = por %p413, %p414
      %s417 = sadd.s32 %s416, 1
      %p420 = scmp.eq.s32.totalorder %s31, 1
      %p421 = scmp.ne.s32.totalorder %s416, %s418
      %p422 = scmp.eq.s32.totalorder %s31, 0
      %p423 = por %p421, %p422
      %p424 = scmp.ne.s32.totalorder %s416, %s418
      %p425 = scmp.eq.s32.totalorder %s36, 1
      %p426 = por %p424, %p425
      %p427 = scmp.ne.s32.totalorder %s418, %s419
      %p428 = scmp.eq.s32.totalorder %s36, 0
      %p429 = por %p427, %p428
      %p430 = scmp.ne.s32.totalorder %s418, %s419
      %p431 = scmp.eq.s32.totalorder %s37, 1
      %p432 = por %p430, %p431
      %p434 = scmp.ne.s32.totalorder %s419, %s433
      %p435 = scmp.eq.s32.totalorder %s37, 0
      %p436 = por %p434, %p435
      %s438 = sadd.s32 %s437, 1
      %p441 = scmp.eq.s32.totalorder %s31, 1
      %p442 = scmp.ne.s32.totalorder %s437, %s439
      %p443 = scmp.eq.s32.totalorder %s31, 0
      %p444 = por %p442, %p443
      %p445 = scmp.ne.s32.totalorder %s437, %s439
      %p446 = scmp.eq.s32.totalorder %s36, 1
      %p447 = por %p445, %p446
      %p448 = scmp.ne.s32.totalorder %s439, %s440
      %p449 = scmp.eq.s32.totalorder %s36, 0
      %p450 = por %p448, %p449
      %p451 = scmp.ne.s32.totalorder %s439, %s440
      %p452 = scmp.eq.s32.totalorder %s37, 1
      %p453 = por %p451, %p452
      %p455 = scmp.ne.s32.totalorder %s440, %s454
      %p456 = scmp.eq.s32.totalorder %s37, 0
      %p457 = por %p455, %p456
      %s459 = sadd.s32 %s458, 1
      %p462 = scmp.eq.s32.totalorder %s31, 1
      %p463 = scmp.ne.s32.totalorder %s458, %s460
      %p464 = scmp.eq.s32.totalorder %s31, 0
      %p465 = por %p463, %p464
      %p466 = scmp.ne.s32.totalorder %s458, %s460
      %p467 = scmp.eq.s32.totalorder %s36, 1
      %p468 = por %p466, %p467
      %p469 = scmp.ne.s32.totalorder %s460, %s461
      %p470 = scmp.eq.s32.totalorder %s36, 0
      %p471 = por %p469, %p470
      %p472 = scmp.ne.s32.totalorder %s460, %s461
      %p473 = scmp.eq.s32.totalorder %s37, 1
      %p474 = por %p472, %p473
      %p476 = scmp.ne.s32.totalorder %s461, %s475
      %p477 = scmp.eq.s32.totalorder %s37, 0
      %p478 = por %p476, %p477
      %s480 = sadd.s32 %s479, 1
      %p483 = scmp.eq.s32.totalorder %s31, 1
      %p484 = scmp.ne.s32.totalorder %s479, %s481
      %p485 = scmp.eq.s32.totalorder %s31, 0
      %p486 = por %p484, %p485
      %p487 = scmp.ne.s32.totalorder %s479, %s481
      %p488 = scmp.eq.s32.totalorder %s36, 1
      %p489 = por %p487, %p488
      %p490 = scmp.ne.s32.totalorder %s481, %s482
      %p491 = scmp.eq.s32.totalorder %s36, 0
      %p492 = por %p490, %p491
      %p493 = scmp.ne.s32.totalorder %s481, %s482
      %p494 = scmp.eq.s32.totalorder %s37, 1
      %p495 = por %p493, %p494
      %p497 = scmp.ne.s32.totalorder %s482, %s496
      %p498 = scmp.eq.s32.totalorder %s37, 0
      %p499 = por %p497, %p498
      %p500 = scmp.le.s32.totalorder 1, %s31
      %p501 = scmp.lt.s32.totalorder %s31, 3
      %p502 = pnand %p500, %p501
      %p503 = pneg %p502
      // Predicated region
      $region9: #{tpu_custom_call.1} parent=5 // pred_check
        _
      $region10: #{tpu_custom_call.1} parent=5 // pred_check_branch
        %505 = sbr.rel (%p502) target = $region12
      $region11: #{tpu_custom_call.1} parent=5 // pred_region
        %s506 = ssub.s32 %s31, 1
        // Predicated region
        $region13: #{tpu_custom_call.1} parent=11 // pred_check
          %p507 = pneg %p52
        $region14: #{tpu_custom_call.1} parent=11 // pred_check_branch
          %509 = sbr.rel (%p507) target = $region16
        $region15: #{tpu_custom_call.1} parent=11 // pred_region
          %s511 = ssub.s32 256, 256
          %512 = vsyncadd [#allocation5], %s511
          %s513 = sshll.u32 [#allocation4], 4
          %s514 = int_to_ptr.vmem [resolvable:$true] %s513
          %519 = dma.hbm_to_vmem [thread:$0]  %s0, 256, %s514, [#allocation5], 128, 128, 8
        $region16: #{tpu_custom_call.1} parent=11 // pred_fallthru
          _
        // Predicated region
        $region17: #{tpu_custom_call.1} parent=11 // pred_check
          %p520 = pneg %p73
        $region18: #{tpu_custom_call.1} parent=11 // pred_check_branch
          %522 = sbr.rel (%p520) target = $region20
        $region19: #{tpu_custom_call.1} parent=11 // pred_region
          %s524 = ssub.s32 256, 256
          %525 = vsyncadd [#allocation8], %s524
          %s526 = sshll.u32 [#allocation7], 4
          %s527 = int_to_ptr.vmem [resolvable:$true] %s526
          %532 = dma.hbm_to_vmem [thread:$0]  %s1, 256, %s527, [#allocation8], 128, 128, 8
        $region20: #{tpu_custom_call.1} parent=11 // pred_fallthru
          _
        // Predicated region
        $region21: #{tpu_custom_call.1} parent=11 // pred_check
          %p533 = pneg %p94
        $region22: #{tpu_custom_call.1} parent=11 // pred_check_branch
          %535 = sbr.rel (%p533) target = $region24
        $region23: #{tpu_custom_call.1} parent=11 // pred_region
          _
        $region24: #{tpu_custom_call.1} parent=11 // pred_fallthru
          _
        // Predicated region
        $region25: #{tpu_custom_call.1} parent=11 // pred_check
          %p536 = pneg %p115
        $region26: #{tpu_custom_call.1} parent=11 // pred_check_branch
          %538 = sbr.rel (%p536) target = $region28
        $region27: #{tpu_custom_call.1} parent=11 // pred_region
          %s540 = ssub.s32 128, 128
          %541 = vsyncadd [#allocation8], %s540
          %s543 = sshll.u32 [#allocation9], 4
          %s544 = int_to_ptr.vmem [resolvable:$true] %s543
          %546 = dma.hbm_to_vmem [thread:$0]  %s3, 128, %s544, [#allocation8]
        $region28: #{tpu_custom_call.1} parent=11 // pred_fallthru
          _
        // Predicated region
        $region29: #{tpu_custom_call.1} parent=11 // pred_check
          %p547 = pneg %p136
        $region30: #{tpu_custom_call.1} parent=11 // pred_check_branch
          %549 = sbr.rel (%p547) target = $region32
        $region31: #{tpu_custom_call.1} parent=11 // pred_region
          %s551 = ssub.s32 256, 256
          %552 = vsyncadd [#allocation11], %s551
          %s553 = sshll.u32 [#allocation10], 4
          %s554 = int_to_ptr.vmem [resolvable:$true] %s553
          %559 = dma.hbm_to_vmem [thread:$0]  %s4, 256, %s554, [#allocation11], 128, 128, 8
        $region32: #{tpu_custom_call.1} parent=11 // pred_fallthru
          _
        // Predicated region
        $region33: #{tpu_custom_call.1} parent=11 // pred_check
          %p560 = pneg %p157
        $region34: #{tpu_custom_call.1} parent=11 // pred_check_branch
          %562 = sbr.rel (%p560) target = $region36
        $region35: #{tpu_custom_call.1} parent=11 // pred_region
          %s564 = ssub.s32 16, 16
          %565 = vsyncadd [#allocation11], %s564
          %s567 = sshll.u32 [#allocation12], 4
          %s568 = int_to_ptr.vmem [resolvable:$true] %s567
          %570 = dma.hbm_to_vmem [thread:$0]  %s5, 16, %s568, [#allocation11]
        $region36: #{tpu_custom_call.1} parent=11 // pred_fallthru
          _
        // Predicated region
        $region37: #{tpu_custom_call.1} parent=11 // pred_check
          %p571 = pneg %p178
        $region38: #{tpu_custom_call.1} parent=11 // pred_check_branch
          %573 = sbr.rel (%p571) target = $region40
        $region39: #{tpu_custom_call.1} parent=11 // pred_region
          _
        $region40: #{tpu_custom_call.1} parent=11 // pred_fallthru
          _
        // Predicated region
        $region41: #{tpu_custom_call.1} parent=11 // pred_check
          %p574 = pneg %p199
        $region42: #{tpu_custom_call.1} parent=11 // pred_check_branch
          %576 = sbr.rel (%p574) target = $region44
        $region43: #{tpu_custom_call.1} parent=11 // pred_region
          %s578 = ssub.s32 128, 128
          %579 = vsyncadd [#allocation14], %s578
          %s581 = sshll.u32 [#allocation13], 4
          %s582 = int_to_ptr.vmem [resolvable:$true] %s581
          %584 = dma.hbm_to_vmem [thread:$0]  %s7, 128, %s582, [#allocation14]
        $region44: #{tpu_custom_call.1} parent=11 // pred_fallthru
          _
        // Predicated region
        $region45: #{tpu_custom_call.1} parent=11 // pred_check
          %p585 = pneg %p298
        $region46: #{tpu_custom_call.1} parent=11 // pred_check_branch
          %587 = sbr.rel (%p585) target = $region48
        $region47: #{tpu_custom_call.1} parent=11 // pred_region
          _
        $region48: #{tpu_custom_call.1} parent=11 // pred_fallthru
          _
        // Predicated region
        $region49: #{tpu_custom_call.1} parent=11 // pred_check
          %p588 = pneg %p345
        $region50: #{tpu_custom_call.1} parent=11 // pred_check_branch
          %590 = sbr.rel (%p588) target = $region52
        $region51: #{tpu_custom_call.1} parent=11 // pred_region
          _
        $region52: #{tpu_custom_call.1} parent=11 // pred_fallthru
          _
        // Predicated region
        $region53: #{tpu_custom_call.1} parent=11 // pred_check
          %p591 = pneg %p366
        $region54: #{tpu_custom_call.1} parent=11 // pred_check_branch
          %593 = sbr.rel (%p591) target = $region56
        $region55: #{tpu_custom_call.1} parent=11 // pred_region
          %s595 = ssub.s32 512, 512
          %596 = vsyncadd [#allocation8], %s595
          %s597 = sshll.u32 [#allocation18], 4
          %s598 = int_to_ptr.vmem [resolvable:$true] %s597
          %603 = dma.hbm_to_vmem [thread:$0]  %s14, 512, %s598, [#allocation8], 128, 128, 8
        $region56: #{tpu_custom_call.1} parent=11 // pred_fallthru
          _
        // Predicated region
        $region57: #{tpu_custom_call.1} parent=11 // pred_check
          %p604 = pneg %p387
        $region58: #{tpu_custom_call.1} parent=11 // pred_check_branch
          %606 = sbr.rel (%p604) target = $region60
        $region59: #{tpu_custom_call.1} parent=11 // pred_region
          _
        $region60: #{tpu_custom_call.1} parent=11 // pred_fallthru
          _
        // Predicated region
        $region61: #{tpu_custom_call.1} parent=11 // pred_check
          %p607 = pneg %p408
        $region62: #{tpu_custom_call.1} parent=11 // pred_check_branch
          %609 = sbr.rel (%p607) target = $region64
        $region63: #{tpu_custom_call.1} parent=11 // pred_region
          %s611 = ssub.s32 512, 512
          %612 = vsyncadd [#allocation11], %s611
          %s613 = sshll.u32 [#allocation19], 4
          %s614 = int_to_ptr.vmem [resolvable:$true] %s613
          %619 = dma.hbm_to_vmem [thread:$0]  %s16, 512, %s614, [#allocation11], 128, 128, 8
        $region64: #{tpu_custom_call.1} parent=11 // pred_fallthru
          _
        // Predicated region
        $region65: #{tpu_custom_call.1} parent=11 // pred_check
          %p620 = pneg %p429
        $region66: #{tpu_custom_call.1} parent=11 // pred_check_branch
          %622 = sbr.rel (%p620) target = $region68
        $region67: #{tpu_custom_call.1} parent=11 // pred_region
          _
        $region68: #{tpu_custom_call.1} parent=11 // pred_fallthru
          _
        // Predicated region
        $region69: #{tpu_custom_call.1} parent=11 // pred_check
          %p623 = pneg %p450
        $region70: #{tpu_custom_call.1} parent=11 // pred_check_branch
          %625 = sbr.rel (%p623) target = $region72
        $region71: #{tpu_custom_call.1} parent=11 // pred_region
          _
        $region72: #{tpu_custom_call.1} parent=11 // pred_fallthru
          _
        // Predicated region
        $region73: #{tpu_custom_call.1} parent=11 // pred_check
          %p626 = pneg %p471
        $region74: #{tpu_custom_call.1} parent=11 // pred_check_branch
          %628 = sbr.rel (%p626) target = $region76
        $region75: #{tpu_custom_call.1} parent=11 // pred_region
          _
        $region76: #{tpu_custom_call.1} parent=11 // pred_fallthru
          _
      $region12: #{tpu_custom_call.1} parent=5 // pred_fallthru
        _
      %p629 = scmp.lt.s32.totalorder %s31, 2
      // Predicated region
      $region77: #{tpu_custom_call.1} parent=5 // pred_check
        %p630 = pneg %p629
      $region78: #{tpu_custom_call.1} parent=5 // pred_check_branch
        %632 = sbr.rel (%p630) target = $region80
      $region79: #{tpu_custom_call.1} parent=5 // pred_region
        // Predicated region
        $region81: #{tpu_custom_call.1} parent=79 // pred_check
          %p633 = pneg %p219
        $region82: #{tpu_custom_call.1} parent=79 // pred_check_branch
          %635 = sbr.rel (%p633) target = $region84
        $region83: #{tpu_custom_call.1} parent=79 // pred_region
          %p636 = scmp.lt.s32.totalorder %s31, 1
          %s637 = scalar_select %p636, %s31, 1
          %s638 = smul.addr %s637, 4
          %s639 = smul.addr %s638, 8
          %s640 = scalar_lea.vmem %s8, %s639
        $region84: #{tpu_custom_call.1} parent=79 // pred_fallthru
          _
        // Predicated region
        $region85: #{tpu_custom_call.1} parent=79 // pred_check
          %p641 = pneg %p245
        $region86: #{tpu_custom_call.1} parent=79 // pred_check_branch
          %643 = sbr.rel (%p641) target = $region88
        $region87: #{tpu_custom_call.1} parent=79 // pred_region
          %s644 = sand.u32 %s31, 1
          %s645 = scalar_lea.sflag [#allocation5], %s644
          %s646 = sand.u32 %s235, 1
          %s647 = smul.addr %s646, 32
          %s648 = scalar_lea.vmem [#allocation15], %s647
          %s650 = ssub.s32 512, 512
          %651 = vsyncadd %s645, %s650
          %s652 = smul.addr %s31, 4
          %s653 = smul.addr %s652, 128
          %s654 = scalar_lea.hbm %s9, %s653
          %s655 = sshll.u32 %s648, 4
          %s656 = int_to_ptr.vmem [resolvable:$true] %s655
          %661 = dma.hbm_to_vmem [thread:$0]  %s654, 512, %s656, %s645, 128, 128, 8
        $region88: #{tpu_custom_call.1} parent=79 // pred_fallthru
          _
        // Predicated region
        $region89: #{tpu_custom_call.1} parent=79 // pred_check
          %p662 = pneg %p271
        $region90: #{tpu_custom_call.1} parent=79 // pred_check_branch
          %664 = sbr.rel (%p662) target = $region92
        $region91: #{tpu_custom_call.1} parent=79 // pred_region
          %s665 = sand.u32 %s31, 1
          %s666 = scalar_lea.sflag [#allocation5], %s665
          %s667 = sand.u32 %s261, 1
          %s668 = scalar_lea.vmem [#allocation16], %s667
          %s670 = ssub.s32 16, 16
          %671 = vsyncadd %s666, %s670
          %s672 = smul.addr %s31, 16
          %s673 = scalar_lea.hbm %s10, %s672
          %s675 = sshll.u32 %s668, 4
          %s676 = int_to_ptr.vmem [resolvable:$true] %s675
          %678 = dma.hbm_to_vmem [thread:$0]  %s673, 16, %s676, %s666
        $region92: #{tpu_custom_call.1} parent=79 // pred_fallthru
          _
        // Predicated region
        $region93: #{tpu_custom_call.1} parent=79 // pred_check
          %p679 = pneg %p318
        $region94: #{tpu_custom_call.1} parent=79 // pred_check_branch
          %681 = sbr.rel (%p679) target = $region96
        $region95: #{tpu_custom_call.1} parent=79 // pred_region
          %s682 = sand.u32 %s31, 1
          %s683 = scalar_lea.sflag [#allocation5], %s682
          %s684 = sand.u32 %s308, 1
          %s685 = smul.addr %s684, 32
          %s686 = scalar_lea.vmem [#allocation17], %s685
          %s688 = ssub.s32 512, 512
          %689 = vsyncadd %s683, %s688
          %s690 = smul.addr %s31, 4
          %s691 = smul.addr %s690, 128
          %s692 = scalar_lea.hbm %s12, %s691
          %s693 = sshll.u32 %s686, 4
          %s694 = int_to_ptr.vmem [resolvable:$true] %s693
          %699 = dma.hbm_to_vmem [thread:$0]  %s692, 512, %s694, %s683, 128, 128, 8
        $region96: #{tpu_custom_call.1} parent=79 // pred_fallthru
          _
      $region80: #{tpu_custom_call.1} parent=5 // pred_fallthru
        _
      %p700 = scmp.le.s32.totalorder 1, %s31
      %p701 = scmp.lt.s32.totalorder %s31, 3
      %p702 = pnand %p700, %p701
      %p703 = pneg %p702
      // Predicated region
      $region97: #{tpu_custom_call.1} parent=5 // pred_check
        _
      $region98: #{tpu_custom_call.1} parent=5 // pred_check_branch
        %705 = sbr.rel (%p702) target = $region100
      $region99: #{tpu_custom_call.1} parent=5 // pred_region
        %s706 = ssub.s32 %s31, 1
        // Predicated region
        $region101: #{tpu_custom_call.1} parent=99 // pred_check
          %p707 = pneg %p52
        $region102: #{tpu_custom_call.1} parent=99 // pred_check_branch
          %709 = sbr.rel (%p707) target = $region104
        $region103: #{tpu_custom_call.1} parent=99 // pred_region
          %710 = dma.done [#allocation5], 256
        $region104: #{tpu_custom_call.1} parent=99 // pred_fallthru
          _
        // Predicated region
        $region105: #{tpu_custom_call.1} parent=99 // pred_check
          %p711 = pneg %p73
        $region106: #{tpu_custom_call.1} parent=99 // pred_check_branch
          %713 = sbr.rel (%p711) target = $region108
        $region107: #{tpu_custom_call.1} parent=99 // pred_region
          %714 = dma.done [#allocation8], 256
        $region108: #{tpu_custom_call.1} parent=99 // pred_fallthru
          _
        // Predicated region
        $region109: #{tpu_custom_call.1} parent=99 // pred_check
          %p715 = pneg %p115
        $region110: #{tpu_custom_call.1} parent=99 // pred_check_branch
          %717 = sbr.rel (%p715) target = $region112
        $region111: #{tpu_custom_call.1} parent=99 // pred_region
          %718 = dma.done [#allocation8], 128
        $region112: #{tpu_custom_call.1} parent=99 // pred_fallthru
          _
        // Predicated region
        $region113: #{tpu_custom_call.1} parent=99 // pred_check
          %p719 = pneg %p136
        $region114: #{tpu_custom_call.1} parent=99 // pred_check_branch
          %721 = sbr.rel (%p719) target = $region116
        $region115: #{tpu_custom_call.1} parent=99 // pred_region
          %722 = dma.done [#allocation11], 256
        $region116: #{tpu_custom_call.1} parent=99 // pred_fallthru
          _
        // Predicated region
        $region117: #{tpu_custom_call.1} parent=99 // pred_check
          %p723 = pneg %p157
        $region118: #{tpu_custom_call.1} parent=99 // pred_check_branch
          %725 = sbr.rel (%p723) target = $region120
        $region119: #{tpu_custom_call.1} parent=99 // pred_region
          %726 = dma.done [#allocation11], 16
        $region120: #{tpu_custom_call.1} parent=99 // pred_fallthru
          _
        // Predicated region
        $region121: #{tpu_custom_call.1} parent=99 // pred_check
          %p727 = pneg %p199
        $region122: #{tpu_custom_call.1} parent=99 // pred_check_branch
          %729 = sbr.rel (%p727) target = $region124
        $region123: #{tpu_custom_call.1} parent=99 // pred_region
          %730 = dma.done [#allocation14], 128
        $region124: #{tpu_custom_call.1} parent=99 // pred_fallthru
          _
        %s731 = sand.u32 %s36, 1
        %s732 = scalar_lea.sflag [#allocation5], %s731
        %s733 = sand.u32 %s238, 1
        %s734 = smul.addr %s733, 32
        %s735 = scalar_lea.vmem [#allocation15], %s734
        // Predicated region
        $region125: #{tpu_custom_call.1} parent=99 // pred_check
          %p736 = pneg %p251
        $region126: #{tpu_custom_call.1} parent=99 // pred_check_branch
          %738 = sbr.rel (%p736) target = $region128
        $region127: #{tpu_custom_call.1} parent=99 // pred_region
          %739 = dma.done %s732, 512
        $region128: #{tpu_custom_call.1} parent=99 // pred_fallthru
          _
        %s740 = sand.u32 %s36, 1
        %s741 = scalar_lea.sflag [#allocation5], %s740
        %s742 = sand.u32 %s264, 1
        %s743 = scalar_lea.vmem [#allocation16], %s742
        // Predicated region
        $region129: #{tpu_custom_call.1} parent=99 // pred_check
          %p744 = pneg %p277
        $region130: #{tpu_custom_call.1} parent=99 // pred_check_branch
          %746 = sbr.rel (%p744) target = $region132
        $region131: #{tpu_custom_call.1} parent=99 // pred_region
          %747 = dma.done %s741, 16
        $region132: #{tpu_custom_call.1} parent=99 // pred_fallthru
          _
        %s748 = sand.u32 %s36, 1
        %s749 = scalar_lea.sflag [#allocation5], %s748
        %s750 = sand.u32 %s311, 1
        %s751 = smul.addr %s750, 32
        %s752 = scalar_lea.vmem [#allocation17], %s751
        // Predicated region
        $region133: #{tpu_custom_call.1} parent=99 // pred_check
          %p753 = pneg %p324
        $region134: #{tpu_custom_call.1} parent=99 // pred_check_branch
          %755 = sbr.rel (%p753) target = $region136
        $region135: #{tpu_custom_call.1} parent=99 // pred_region
          %756 = dma.done %s749, 512
        $region136: #{tpu_custom_call.1} parent=99 // pred_fallthru
          _
        // Predicated region
        $region137: #{tpu_custom_call.1} parent=99 // pred_check
          %p757 = pneg %p366
        $region138: #{tpu_custom_call.1} parent=99 // pred_check_branch
          %759 = sbr.rel (%p757) target = $region140
        $region139: #{tpu_custom_call.1} parent=99 // pred_region
          %760 = dma.done [#allocation8], 512
        $region140: #{tpu_custom_call.1} parent=99 // pred_fallthru
          _
        // Predicated region
        $region141: #{tpu_custom_call.1} parent=99 // pred_check
          %p761 = pneg %p408
        $region142: #{tpu_custom_call.1} parent=99 // pred_check_branch
          %763 = sbr.rel (%p761) target = $region144
        $region143: #{tpu_custom_call.1} parent=99 // pred_region
          %764 = dma.done [#allocation11], 512
        $region144: #{tpu_custom_call.1} parent=99 // pred_fallthru
          _
        %p765 = pneg %p52
        %p766 = pneg %p49
        %p767 = pneg %p73
        %p768 = pneg %p70
        %p769 = pneg %p94
        %p770 = pneg %p91
        %p771 = pneg %p115
        %p772 = pneg %p112
        %p773 = pneg %p136
        %p774 = pneg %p133
        %p775 = pneg %p157
        %p776 = pneg %p154
        %p777 = pneg %p178
        %p778 = pneg %p175
        %p779 = pneg %p199
        %p780 = pneg %p196
        %p781 = scmp.lt.s32.totalorder %s36, 1
        %s782 = scalar_select %p781, %s36, 1
        %s783 = smul.addr %s782, 4
        %s784 = smul.addr %s783, 8
        %s785 = scalar_lea.vmem %s8, %s784
        %p786 = pneg %p225
        %p787 = pneg %p222
        %s788 = sand.u32 %s36, 1
        %s789 = scalar_lea.sflag [#allocation5], %s788
        %s790 = sand.u32 %s238, 1
        %s791 = smul.addr %s790, 32
        %s792 = scalar_lea.vmem [#allocation15], %s791
        %p793 = pneg %p251
        %p794 = pneg %p248
        %s795 = sand.u32 %s36, 1
        %s796 = scalar_lea.sflag [#allocation5], %s795
        %s797 = sand.u32 %s264, 1
        %s798 = scalar_lea.vmem [#allocation16], %s797
        %p799 = pneg %p277
        %p800 = pneg %p274
        %p801 = pneg %p298
        %p802 = pneg %p295
        %s803 = sand.u32 %s36, 1
        %s804 = scalar_lea.sflag [#allocation5], %s803
        %s805 = sand.u32 %s311, 1
        %s806 = smul.addr %s805, 32
        %s807 = scalar_lea.vmem [#allocation17], %s806
        %p808 = pneg %p324
        %p809 = pneg %p321
        %p810 = pneg %p345
        %p811 = pneg %p342
        %p812 = pneg %p366
        %p813 = pneg %p363
        %p814 = pneg %p387
        %p815 = pneg %p384
        %p816 = pneg %p408
        %p817 = pneg %p405
        %p818 = pneg %p429
        %p819 = pneg %p426
        %p820 = pneg %p450
        %p821 = pneg %p447
        %p822 = pneg %p471
        %p823 = pneg %p468
        %p824 = pneg %p492
        %p825 = pneg %p489
        %p826 = scmp.lt.s32.totalorder %s36, 1
        %s827 = scalar_select %p826, %s36, 1
        %s828 = smul.addr %s827, 4
        %s829 = smul.addr %s828, 8
        %s830 = scalar_lea.vmem %s8, %s829
        %p831 = scmp.eq.s32.totalorder %s36, 0
        // Predicated region
        $region145: #{tpu_custom_call.1} parent=99 // pred_check
          %p832 = pneg %p831
        $region146: #{tpu_custom_call.1} parent=99 // pred_check_branch
          %834 = sbr.rel (%p832) target = $region148
        $region147: #{tpu_custom_call.1} parent=99 // pred_region
          %v835 = vld [vmem:[#allocation4] sm:$0xff]
          %v836 = vld [vmem:[#allocation4 + $0x8] sm:$0xff]
          %v837 = vld [vmem:[#allocation7] sm:$0xff]
          %v838 = vld [vmem:[#allocation7 + $0x8] sm:$0xf]
          %v839 = vld [vmem:[%s2] sm:$0x1]
          %v841 = vlaneseq
          %v842 = vshrl.u32 %v841, 7
          %v843 = vsub.s32 0, %v842
          %v844 = vrot.slane %v839, %v843
          %vm846 = vcmask 97280
          %v848 = vsel %vm846, %v835, 0
          %v851 = vsel %vm846, %v836, 0
          %vm853 = vcmask 1043456
          %v855 = vsel %vm853, %v838, 0
          %857 = vmatprep.subr.mxu0 0.0
          %858 = vmatpush1.msra.mxu0 %v837
          %859 = vmatprep.subr.mxu0 0.0
          %860 = vmatpush1.msra.mxu0 %v855
          %861 = vmatprep.subr.mxu0 0.0
          %862 = vmatpush1.msra.mxu0 0.0
          %863 = vmatprep.subr.mxu0 0.0
          %864 = vmatpush1.msra.mxu0 0.0
          %865 = vmatprep.subr.mxu0 0.0
          %866 = vmatpush1.msra.mxu0 0.0
          %867 = vmatprep.subr.mxu0 0.0
          %868 = vmatpush1.msra.mxu0 0.0
          %869 = vmatprep.subr.mxu0 0.0
          %870 = vmatpush1.msra.mxu0 0.0
          %871 = vmatprep.subr.mxu0 0.0
          %872 = vmatpush1.msra.mxu0 0.0
          %873 = vmatprep.subr.mxu0 0.0
          %874 = vmatpush1.msra.mxu0 0.0
          %875 = vmatprep.subr.mxu0 0.0
          %876 = vmatpush1.msra.mxu0 0.0
          %877 = vmatprep.subr.mxu0 0.0
          %878 = vmatpush1.msra.mxu0 0.0
          %879 = vmatprep.subr.mxu0 0.0
          %880 = vmatpush1.msra.mxu0 0.0
          %881 = vmatprep.subr.mxu0 0.0
          %882 = vmatpush1.msra.mxu0 0.0
          %883 = vmatprep.subr.mxu0 0.0
          %884 = vmatpush1.msra.mxu0 0.0
          %885 = vmatprep.subr.mxu0 0.0
          %886 = vmatpush1.msra.mxu0 0.0
          %887 = vmatprep.subr.mxu0 0.0
          %888 = vmatpush1.msra.mxu0 0.0
          %889 = vmatprep.subr.mxu0 0.0
          %890 = vmatpush1.msra.mxu0 0.0
          %891 = vmatprep.subr.mxu0 0.0
          %892 = vmatpush1.msra.mxu0 0.0
          %893 = vmatprep.subr.mxu0 0.0
          %894 = vmatpush1.msra.mxu0 0.0
          %895 = vmatprep.subr.mxu0 0.0
          %896 = vmatpush1.msra.mxu0 0.0
          %897 = vmatprep.subr.mxu0 0.0
          %898 = vmatpush1.msra.mxu0 0.0
          %899 = vmatprep.subr.mxu0 0.0
          %900 = vmatpush1.msra.mxu0 0.0
          %901 = vmatprep.subr.mxu0 0.0
          %902 = vmatpush1.msra.mxu0 0.0
          %903 = vmatprep.subr.mxu0 0.0
          %904 = vmatpush1.msra.mxu0 0.0
          %905 = vmatprep.subr.mxu0 0.0
          %906 = vmatpush1.msra.mxu0 0.0
          %907 = vmatprep.subr.mxu0 0.0
          %908 = vmatpush1.msra.mxu0 0.0
          %909 = vmatprep.subr.mxu0 0.0
          %910 = vmatpush1.msra.mxu0 0.0
          %911 = vmatprep.subr.mxu0 0.0
          %912 = vmatpush1.msra.mxu0 0.0
          %913 = vmatprep.subr.mxu0 0.0
          %914 = vmatpush1.msra.mxu0 0.0
          %915 = vmatprep.subr.mxu0 0.0
          %916 = vmatpush1.msra.mxu0 0.0
          %917 = vmatprep.subr.mxu0 0.0
          %918 = vmatpush1.msra.mxu0 0.0
          %919 = vmatprep.subr.mxu0 0.0
          %920 = vmatpush1.msra.mxu0 0.0
          %921 = vmatprep.mubr.f32.mxu0 0.0
          %922 = vmatmul.mubr.f32.gmra.mrb[0].mxu0 %v848
          %v923 = vpop.f32.mrb[0].mxu0
          %v924 = vadd.f32 %v844, %v923
          %v925 = vpop.f32.mrb[0].mxu0
          %926 = vmatprep.mubr.f32.mxu0 0.0
          %927 = vmatmul.mubr.f32.gmra.mrb[0].mxu0 %v851
          %v928 = vpop.f32.mrb[0].mxu0
          %v929 = vadd.f32 %v844, %v928
          %v930 = vpop.f32.mrb[0].mxu0
          %931 = vdwg.mxu0
          %vm932 = vcmask 261120
          %933 = vst.msk [vmem:[#allocation2] sm:$0xff] %vm932, %v924
          %934 = vst.msk [vmem:[#allocation2 + $0x8] sm:$0xff] %vm932, %v929
          %v935 = vld [vmem:[#allocation9] sm:$0xff]
          %v936 = vld [vmem:[#allocation10] sm:$0xff]
          %v937 = vld [vmem:[#allocation10 + $0x8] sm:$0x3]
          %v938 = vld [vmem:[#allocation12] sm:$0x1]
          %v940 = vlaneseq
          %v941 = vshrl.u32 %v940, 7
          %v942 = vsub.s32 0, %v941
          %v943 = vrot.slane %v938, %v942
          %vm945 = vcmask 80896
          %v947 = vsel %vm945, %v935, 0
          %vm949 = vcmask 1041408
          %v951 = vsel %vm949, %v937, 0
          %953 = vmatprep.subr.mxu0 0.0
          %954 = vmatpush1.msra.mxu0 %v936
          %955 = vmatprep.subr.mxu0 0.0
          %956 = vmatpush1.msra.mxu0 %v951
          %957 = vmatprep.subr.mxu0 0.0
          %958 = vmatpush1.msra.mxu0 0.0
          %959 = vmatprep.subr.mxu0 0.0
          %960 = vmatpush1.msra.mxu0 0.0
          %961 = vmatprep.subr.mxu0 0.0
          %962 = vmatpush1.msra.mxu0 0.0
          %963 = vmatprep.subr.mxu0 0.0
          %964 = vmatpush1.msra.mxu0 0.0
          %965 = vmatprep.subr.mxu0 0.0
          %966 = vmatpush1.msra.mxu0 0.0
          %967 = vmatprep.subr.mxu0 0.0
          %968 = vmatpush1.msra.mxu0 0.0
          %969 = vmatprep.subr.mxu0 0.0
          %970 = vmatpush1.msra.mxu0 0.0
          %971 = vmatprep.subr.mxu0 0.0
          %972 = vmatpush1.msra.mxu0 0.0
          %973 = vmatprep.subr.mxu0 0.0
          %974 = vmatpush1.msra.mxu0 0.0
          %975 = vmatprep.subr.mxu0 0.0
          %976 = vmatpush1.msra.mxu0 0.0
          %977 = vmatprep.subr.mxu0 0.0
          %978 = vmatpush1.msra.mxu0 0.0
          %979 = vmatprep.subr.mxu0 0.0
          %980 = vmatpush1.msra.mxu0 0.0
          %981 = vmatprep.subr.mxu0 0.0
          %982 = vmatpush1.msra.mxu0 0.0
          %983 = vmatprep.subr.mxu0 0.0
          %984 = vmatpush1.msra.mxu0 0.0
          %985 = vmatprep.subr.mxu0 0.0
          %986 = vmatpush1.msra.mxu0 0.0
          %987 = vmatprep.subr.mxu0 0.0
          %988 = vmatpush1.msra.mxu0 0.0
          %989 = vmatprep.subr.mxu0 0.0
          %990 = vmatpush1.msra.mxu0 0.0
          %991 = vmatprep.subr.mxu0 0.0
          %992 = vmatpush1.msra.mxu0 0.0
          %993 = vmatprep.subr.mxu0 0.0
          %994 = vmatpush1.msra.mxu0 0.0
          %995 = vmatprep.subr.mxu0 0.0
          %996 = vmatpush1.msra.mxu0 0.0
          %997 = vmatprep.subr.mxu0 0.0
          %998 = vmatpush1.msra.mxu0 0.0
          %999 = vmatprep.subr.mxu0 0.0
          %1000 = vmatpush1.msra.mxu0 0.0
          %1001 = vmatprep.subr.mxu0 0.0
          %1002 = vmatpush1.msra.mxu0 0.0
          %1003 = vmatprep.subr.mxu0 0.0
          %1004 = vmatpush1.msra.mxu0 0.0
          %1005 = vmatprep.subr.mxu0 0.0
          %1006 = vmatpush1.msra.mxu0 0.0
          %1007 = vmatprep.subr.mxu0 0.0
          %1008 = vmatpush1.msra.mxu0 0.0
          %1009 = vmatprep.subr.mxu0 0.0
          %1010 = vmatpush1.msra.mxu0 0.0
          %1011 = vmatprep.subr.mxu0 0.0
          %1012 = vmatpush1.msra.mxu0 0.0
          %1013 = vmatprep.subr.mxu0 0.0
          %1014 = vmatpush1.msra.mxu0 0.0
          %1015 = vmatprep.subr.mxu0 0.0
          %1016 = vmatpush1.msra.mxu0 0.0
          %1017 = vmatprep.mubr.f32.mxu0 0.0
          %1018 = vmatmul.mubr.f32.gmra.mrb[0].mxu0 %v947
          %v1019 = vpop.f32.mrb[0].mxu0
          %v1020 = vadd.f32 %v943, %v1019
          %v1021 = vpop.f32.mrb[0].mxu0
          %1022 = vdwg.mxu0
          %1023 = vst.msk [vmem:[#allocation2 + $0x10] sm:$0xff] %vm932, %v1020
          %v1024 = vld [vmem:[%s11] sm:$0xff]
          %v1025 = vld [vmem:[%s11 + $0x8] sm:$0xff]
          %v1026 = vld [vmem:[%s11 + $0x10] sm:$0xff]
          %v1027 = vld [vmem:[%s11 + $0x18] sm:$0xff]
          %v1029 = vsel %vm932, %v924, 0
          %v1032 = vsel %vm932, %v929, 0
          %1034 = vmatprep.subr.mxu0 0.0
          %1035 = vmatpush1.msra.mxu0 %v1024
          %1036 = vmatprep.subr.mxu0 0.0
          %1037 = vmatpush1.msra.mxu0 %v1025
          %1038 = vmatprep.subr.mxu0 0.0
          %1039 = vmatpush1.msra.mxu0 %v1026
          %1040 = vmatprep.subr.mxu0 0.0
          %1041 = vmatpush1.msra.mxu0 %v1027
          %1042 = vmatprep.subr.mxu0 0.0
          %1043 = vmatpush1.msra.mxu0 0.0
          %1044 = vmatprep.subr.mxu0 0.0
          %1045 = vmatpush1.msra.mxu0 0.0
          %1046 = vmatprep.subr.mxu0 0.0
          %1047 = vmatpush1.msra.mxu0 0.0
          %1048 = vmatprep.subr.mxu0 0.0
          %1049 = vmatpush1.msra.mxu0 0.0
          %1050 = vmatprep.subr.mxu0 0.0
          %1051 = vmatpush1.msra.mxu0 0.0
          %1052 = vmatprep.subr.mxu0 0.0
          %1053 = vmatpush1.msra.mxu0 0.0
          %1054 = vmatprep.subr.mxu0 0.0
          %1055 = vmatpush1.msra.mxu0 0.0
          %1056 = vmatprep.subr.mxu0 0.0
          %1057 = vmatpush1.msra.mxu0 0.0
          %1058 = vmatprep.subr.mxu0 0.0
          %1059 = vmatpush1.msra.mxu0 0.0
          %1060 = vmatprep.subr.mxu0 0.0
          %1061 = vmatpush1.msra.mxu0 0.0
          %1062 = vmatprep.subr.mxu0 0.0
          %1063 = vmatpush1.msra.mxu0 0.0
          %1064 = vmatprep.subr.mxu0 0.0
          %1065 = vmatpush1.msra.mxu0 0.0
          %1066 = vmatprep.subr.mxu0 0.0
          %1067 = vmatpush1.msra.mxu0 0.0
          %1068 = vmatprep.subr.mxu0 0.0
          %1069 = vmatpush1.msra.mxu0 0.0
          %1070 = vmatprep.subr.mxu0 0.0
          %1071 = vmatpush1.msra.mxu0 0.0
          %1072 = vmatprep.subr.mxu0 0.0
          %1073 = vmatpush1.msra.mxu0 0.0
          %1074 = vmatprep.subr.mxu0 0.0
          %1075 = vmatpush1.msra.mxu0 0.0
          %1076 = vmatprep.subr.mxu0 0.0
          %1077 = vmatpush1.msra.mxu0 0.0
          %1078 = vmatprep.subr.mxu0 0.0
          %1079 = vmatpush1.msra.mxu0 0.0
          %1080 = vmatprep.subr.mxu0 0.0
          %1081 = vmatpush1.msra.mxu0 0.0
          %1082 = vmatprep.subr.mxu0 0.0
          %1083 = vmatpush1.msra.mxu0 0.0
          %1084 = vmatprep.subr.mxu0 0.0
          %1085 = vmatpush1.msra.mxu0 0.0
          %1086 = vmatprep.subr.mxu0 0.0
          %1087 = vmatpush1.msra.mxu0 0.0
          %1088 = vmatprep.subr.mxu0 0.0
          %1089 = vmatpush1.msra.mxu0 0.0
          %1090 = vmatprep.subr.mxu0 0.0
          %1091 = vmatpush1.msra.mxu0 0.0
          %1092 = vmatprep.subr.mxu0 0.0
          %1093 = vmatpush1.msra.mxu0 0.0
          %1094 = vmatprep.subr.mxu0 0.0
          %1095 = vmatpush1.msra.mxu0 0.0
          %1096 = vmatprep.subr.mxu0 0.0
          %1097 = vmatpush1.msra.mxu0 0.0
          %1098 = vmatprep.mubr.f32.mxu0 0.0
          %1099 = vmatmul.mubr.f32.gmra.mrb[0].mxu0 %v1029
          %v1100 = vpop.f32.mrb[0].mxu0
          %v1101 = vadd.f32 0.0, %v1100
          %v1102 = vpop.f32.mrb[0].mxu0
          %1103 = vmatprep.mubr.f32.mxu0 0.0
          %1104 = vmatmul.mubr.f32.gmra.mrb[0].mxu0 %v1032
          %v1105 = vpop.f32.mrb[0].mxu0
          %v1106 = vadd.f32 0.0, %v1105
          %v1107 = vpop.f32.mrb[0].mxu0
          %1108 = vdwg.mxu0
          %1109 = vst.msk [vmem:[#allocation3] sm:$0xff] %vm932, %v1101
          %1110 = vst.msk [vmem:[#allocation3 + $0x8] sm:$0xff] %vm932, %v1106
        $region148: #{tpu_custom_call.1} parent=99 // pred_fallthru
          _
        %v1111 = vld [vmem:[#allocation2] sm:$0xff]
        %v1112 = vld [vmem:[#allocation2 + $0x8] sm:$0xff]
        %v1113 = vld [vmem:[#allocation2 + $0x10] sm:$0xff]
        %v1114 = vld [vmem:[%s830] sm:$0xff]
        %v1115 = vld [vmem:[%s830 + $0x8] sm:$0xff]
        %v1116 = vld [vmem:[%s830 + $0x10] sm:$0xff]
        %v1117 = vld [vmem:[%s830 + $0x18] sm:$0xff]
        %vm1118 = vcmask 261120
        %v1120 = vsel %vm1118, %v1111, 0
        %v1123 = vsel %vm1118, %v1112, 0
        %v1126 = vsel %vm1118, %v1113, 0
        %1128 = vmatprep.subr.mxu0 0.0
        %1129 = vmatpush1.msra.mxu0 %v1114
        %1130 = vmatprep.subr.mxu0 0.0
        %1131 = vmatpush1.msra.mxu0 %v1115
        %1132 = vmatprep.subr.mxu0 0.0
        %1133 = vmatpush1.msra.mxu0 %v1116
        %1134 = vmatprep.subr.mxu0 0.0
        %1135 = vmatpush1.msra.mxu0 %v1117
        %1136 = vmatprep.subr.mxu0 0.0
        %1137 = vmatpush1.msra.mxu0 0.0
        %1138 = vmatprep.subr.mxu0 0.0
        %1139 = vmatpush1.msra.mxu0 0.0
        %1140 = vmatprep.subr.mxu0 0.0
        %1141 = vmatpush1.msra.mxu0 0.0
        %1142 = vmatprep.subr.mxu0 0.0
        %1143 = vmatpush1.msra.mxu0 0.0
        %1144 = vmatprep.subr.mxu0 0.0
        %1145 = vmatpush1.msra.mxu0 0.0
        %1146 = vmatprep.subr.mxu0 0.0
        %1147 = vmatpush1.msra.mxu0 0.0
        %1148 = vmatprep.subr.mxu0 0.0
        %1149 = vmatpush1.msra.mxu0 0.0
        %1150 = vmatprep.subr.mxu0 0.0
        %1151 = vmatpush1.msra.mxu0 0.0
        %1152 = vmatprep.subr.mxu0 0.0
        %1153 = vmatpush1.msra.mxu0 0.0
        %1154 = vmatprep.subr.mxu0 0.0
        %1155 = vmatpush1.msra.mxu0 0.0
        %1156 = vmatprep.subr.mxu0 0.0
        %1157 = vmatpush1.msra.mxu0 0.0
        %1158 = vmatprep.subr.mxu0 0.0
        %1159 = vmatpush1.msra.mxu0 0.0
        %1160 = vmatprep.subr.mxu0 0.0
        %1161 = vmatpush1.msra.mxu0 0.0
        %1162 = vmatprep.subr.mxu0 0.0
        %1163 = vmatpush1.msra.mxu0 0.0
        %1164 = vmatprep.subr.mxu0 0.0
        %1165 = vmatpush1.msra.mxu0 0.0
        %1166 = vmatprep.subr.mxu0 0.0
        %1167 = vmatpush1.msra.mxu0 0.0
        %1168 = vmatprep.subr.mxu0 0.0
        %1169 = vmatpush1.msra.mxu0 0.0
        %1170 = vmatprep.subr.mxu0 0.0
        %1171 = vmatpush1.msra.mxu0 0.0
        %1172 = vmatprep.subr.mxu0 0.0
        %1173 = vmatpush1.msra.mxu0 0.0
        %1174 = vmatprep.subr.mxu0 0.0
        %1175 = vmatpush1.msra.mxu0 0.0
        %1176 = vmatprep.subr.mxu0 0.0
        %1177 = vmatpush1.msra.mxu0 0.0
        %1178 = vmatprep.subr.mxu0 0.0
        %1179 = vmatpush1.msra.mxu0 0.0
        %1180 = vmatprep.subr.mxu0 0.0
        %1181 = vmatpush1.msra.mxu0 0.0
        %1182 = vmatprep.subr.mxu0 0.0
        %1183 = vmatpush1.msra.mxu0 0.0
        %1184 = vmatprep.subr.mxu0 0.0
        %1185 = vmatpush1.msra.mxu0 0.0
        %1186 = vmatprep.subr.mxu0 0.0
        %1187 = vmatpush1.msra.mxu0 0.0
        %1188 = vmatprep.subr.mxu0 0.0
        %1189 = vmatpush1.msra.mxu0 0.0
        %1190 = vmatprep.subr.mxu0 0.0
        %1191 = vmatpush1.msra.mxu0 0.0
        %1192 = vmatprep.mubr.f32.mxu0 0.0
        %1193 = vmatmul.mubr.f32.gmra.mrb[0].mxu0 %v1120
        %v1194 = vpop.f32.mrb[0].mxu0
        %v1195 = vadd.f32 0.0, %v1194
        %v1196 = vpop.f32.mrb[0].mxu0
        %1197 = vmatprep.mubr.f32.mxu0 0.0
        %1198 = vmatmul.mubr.f32.gmra.mrb[0].mxu0 %v1123
        %v1199 = vpop.f32.mrb[0].mxu0
        %v1200 = vadd.f32 0.0, %v1199
        %v1201 = vpop.f32.mrb[0].mxu0
        %1202 = vmatprep.mubr.f32.mxu0 0.0
        %1203 = vmatmul.mubr.f32.gmra.mrb[0].mxu0 %v1126
        %v1204 = vpop.f32.mrb[0].mxu0
        %v1205 = vadd.f32 0.0, %v1204
        %v1206 = vpop.f32.mrb[0].mxu0
        %1207 = vdwg.mxu0
        %v1208 = vld [vmem:[%s735] sm:$0xff]
        %v1209 = vld [vmem:[%s735 + $0x8] sm:$0xff]
        %v1210 = vld [vmem:[%s735 + $0x10] sm:$0xff]
        %v1211 = vld [vmem:[%s735 + $0x18] sm:$0xff]
        %1212 = vmatprep.subr.mxu0 0.0
        %1213 = vmatpush1.msra.mxu0 %v1208
        %1214 = vmatprep.subr.mxu0 0.0
        %1215 = vmatpush1.msra.mxu0 %v1209
        %1216 = vmatprep.subr.mxu0 0.0
        %1217 = vmatpush1.msra.mxu0 %v1210
        %1218 = vmatprep.subr.mxu0 0.0
        %1219 = vmatpush1.msra.mxu0 %v1211
        %1220 = vmatprep.subr.mxu0 0.0
        %1221 = vmatpush1.msra.mxu0 0.0
        %1222 = vmatprep.subr.mxu0 0.0
        %1223 = vmatpush1.msra.mxu0 0.0
        %1224 = vmatprep.subr.mxu0 0.0
        %1225 = vmatpush1.msra.mxu0 0.0
        %1226 = vmatprep.subr.mxu0 0.0
        %1227 = vmatpush1.msra.mxu0 0.0
        %1228 = vmatprep.subr.mxu0 0.0
        %1229 = vmatpush1.msra.mxu0 0.0
        %1230 = vmatprep.subr.mxu0 0.0
        %1231 = vmatpush1.msra.mxu0 0.0
        %1232 = vmatprep.subr.mxu0 0.0
        %1233 = vmatpush1.msra.mxu0 0.0
        %1234 = vmatprep.subr.mxu0 0.0
        %1235 = vmatpush1.msra.mxu0 0.0
        %1236 = vmatprep.subr.mxu0 0.0
        %1237 = vmatpush1.msra.mxu0 0.0
        %1238 = vmatprep.subr.mxu0 0.0
        %1239 = vmatpush1.msra.mxu0 0.0
        %1240 = vmatprep.subr.mxu0 0.0
        %1241 = vmatpush1.msra.mxu0 0.0
        %1242 = vmatprep.subr.mxu0 0.0
        %1243 = vmatpush1.msra.mxu0 0.0
        %1244 = vmatprep.subr.mxu0 0.0
        %1245 = vmatpush1.msra.mxu0 0.0
        %1246 = vmatprep.subr.mxu0 0.0
        %1247 = vmatpush1.msra.mxu0 0.0
        %1248 = vmatprep.subr.mxu0 0.0
        %1249 = vmatpush1.msra.mxu0 0.0
        %1250 = vmatprep.subr.mxu0 0.0
        %1251 = vmatpush1.msra.mxu0 0.0
        %1252 = vmatprep.subr.mxu0 0.0
        %1253 = vmatpush1.msra.mxu0 0.0
        %1254 = vmatprep.subr.mxu0 0.0
        %1255 = vmatpush1.msra.mxu0 0.0
        %1256 = vmatprep.subr.mxu0 0.0
        %1257 = vmatpush1.msra.mxu0 0.0
        %1258 = vmatprep.subr.mxu0 0.0
        %1259 = vmatpush1.msra.mxu0 0.0
        %1260 = vmatprep.subr.mxu0 0.0
        %1261 = vmatpush1.msra.mxu0 0.0
        %1262 = vmatprep.subr.mxu0 0.0
        %1263 = vmatpush1.msra.mxu0 0.0
        %1264 = vmatprep.subr.mxu0 0.0
        %1265 = vmatpush1.msra.mxu0 0.0
        %1266 = vmatprep.subr.mxu0 0.0
        %1267 = vmatpush1.msra.mxu0 0.0
        %1268 = vmatprep.subr.mxu0 0.0
        %1269 = vmatpush1.msra.mxu0 0.0
        %1270 = vmatprep.subr.mxu0 0.0
        %1271 = vmatpush1.msra.mxu0 0.0
        %1272 = vmatprep.subr.mxu0 0.0
        %1273 = vmatpush1.msra.mxu0 0.0
        %1274 = vmatprep.subr.mxu0 0.0
        %1275 = vmatpush1.msra.mxu0 0.0
        %1276 = vmatprep.mubr.f32.mxu0 0.0
        %1277 = vmatmul.mubr.f32.gmra.mrb[0].mxu0 %v1120
        %v1278 = vpop.f32.mrb[0].mxu0
        %v1279 = vadd.f32 0.0, %v1278
        %v1280 = vpop.f32.mrb[0].mxu0
        %1281 = vmatprep.mubr.f32.mxu0 0.0
        %1282 = vmatmul.mubr.f32.gmra.mrb[0].mxu0 %v1123
        %v1283 = vpop.f32.mrb[0].mxu0
        %v1284 = vadd.f32 0.0, %v1283
        %v1285 = vpop.f32.mrb[0].mxu0
        %1286 = vmatprep.mubr.f32.mxu0 0.0
        %1287 = vmatmul.mubr.f32.gmra.mrb[0].mxu0 %v1126
        %v1288 = vpop.f32.mrb[0].mxu0
        %v1289 = vadd.f32 0.0, %v1288
        %v1290 = vpop.f32.mrb[0].mxu0
        %1291 = vdwg.mxu0
        %v1292 = vld [vmem:[%s6] sm:$0xff]
        %v1293 = vld [vmem:[%s6 + $0x8] sm:$0xff]
        %vm1294 = vcmask 64512
        %v1296 = vsel %vm1294, %v1292, 0
        %v1299 = vsel %vm1294, %v1293, 0
        %1301 = vmatprep.subr.mxu0 0.0
        %1302 = vmatpush1.msra.mxu0 %v1205
        %1303 = vmatprep.subr.mxu0 0.0
        %1304 = vmatpush1.msra.mxu0 0.0
        %1305 = vmatprep.subr.mxu0 0.0
        %1306 = vmatpush1.msra.mxu0 0.0
        %1307 = vmatprep.subr.mxu0 0.0
        %1308 = vmatpush1.msra.mxu0 0.0
        %1309 = vmatprep.subr.mxu0 0.0
        %1310 = vmatpush1.msra.mxu0 0.0
        %1311 = vmatprep.subr.mxu0 0.0
        %1312 = vmatpush1.msra.mxu0 0.0
        %1313 = vmatprep.subr.mxu0 0.0
        %1314 = vmatpush1.msra.mxu0 0.0
        %1315 = vmatprep.subr.mxu0 0.0
        %1316 = vmatpush1.msra.mxu0 0.0
        %1317 = vmatprep.subr.mxu0 0.0
        %1318 = vmatpush1.msra.mxu0 0.0
        %1319 = vmatprep.subr.mxu0 0.0
        %1320 = vmatpush1.msra.mxu0 0.0
        %1321 = vmatprep.subr.mxu0 0.0
        %1322 = vmatpush1.msra.mxu0 0.0
        %1323 = vmatprep.subr.mxu0 0.0
        %1324 = vmatpush1.msra.mxu0 0.0
        %1325 = vmatprep.subr.mxu0 0.0
        %1326 = vmatpush1.msra.mxu0 0.0
        %1327 = vmatprep.subr.mxu0 0.0
        %1328 = vmatpush1.msra.mxu0 0.0
        %1329 = vmatprep.subr.mxu0 0.0
        %1330 = vmatpush1.msra.mxu0 0.0
        %1331 = vmatprep.subr.mxu0 0.0
        %1332 = vmatpush1.msra.mxu0 0.0
        %1333 = vmatprep.subr.mxu0 0.0
        %1334 = vmatpush1.msra.mxu0 0.0
        %1335 = vmatprep.subr.mxu0 0.0
        %1336 = vmatpush1.msra.mxu0 0.0
        %1337 = vmatprep.subr.mxu0 0.0
        %1338 = vmatpush1.msra.mxu0 0.0
        %1339 = vmatprep.subr.mxu0 0.0
        %1340 = vmatpush1.msra.mxu0 0.0
        %1341 = vmatprep.subr.mxu0 0.0
        %1342 = vmatpush1.msra.mxu0 0.0
        %1343 = vmatprep.subr.mxu0 0.0
        %1344 = vmatpush1.msra.mxu0 0.0
        %1345 = vmatprep.subr.mxu0 0.0
        %1346 = vmatpush1.msra.mxu0 0.0
        %1347 = vmatprep.subr.mxu0 0.0
        %1348 = vmatpush1.msra.mxu0 0.0
        %1349 = vmatprep.subr.mxu0 0.0
        %1350 = vmatpush1.msra.mxu0 0.0
        %1351 = vmatprep.subr.mxu0 0.0
        %1352 = vmatpush1.msra.mxu0 0.0
        %1353 = vmatprep.subr.mxu0 0.0
        %1354 = vmatpush1.msra.mxu0 0.0
        %1355 = vmatprep.subr.mxu0 0.0
        %1356 = vmatpush1.msra.mxu0 0.0
        %1357 = vmatprep.subr.mxu0 0.0
        %1358 = vmatpush1.msra.mxu0 0.0
        %1359 = vmatprep.subr.mxu0 0.0
        %1360 = vmatpush1.msra.mxu0 0.0
        %1361 = vmatprep.subr.mxu0 0.0
        %1362 = vmatpush1.msra.mxu0 0.0
        %1363 = vmatprep.subr.mxu0 0.0
        %1364 = vmatpush1.msra.mxu0 0.0
        %1365 = vmatprep.mubr.f32.mxu0 0.0
        %1366 = vmatmul.mubr.f32.gmra.mrb[0].mxu0 %v1296
        %v1367 = vpop.f32.mrb[0].mxu0
        %v1368 = vadd.f32 %v1279, %v1367
        %v1369 = vpop.f32.mrb[0].mxu0
        %1370 = vmatprep.mubr.f32.mxu0 0.0
        %1371 = vmatmul.mubr.f32.gmra.mrb[0].mxu0 %v1299
        %v1372 = vpop.f32.mrb[0].mxu0
        %v1373 = vadd.f32 %v1284, %v1372
        %v1374 = vpop.f32.mrb[0].mxu0
        %1375 = vdwg.mxu0
        %v1376 = vld [vmem:[%s743] sm:$0x1]
        %v1378 = vlaneseq
        %v1379 = vshrl.u32 %v1378, 7
        %v1380 = vsub.s32 0, %v1379
        %v1381 = vrot.slane %v1376, %v1380
        %v1383 = vadd.f32 %v1368, %v1381
        %v1384 = vadd.f32 %v1373, %v1381
        %v1385 = vmax.f32 %v1383, 0.0
        %v1386 = vmax.f32 %v1384, 0.0
        %v1387 = vld [vmem:[#allocation13] sm:$0xff]
        %vm1388 = vcmask 130048
        %v1390 = vsel %vm1388, %v1387, 0
        %1392 = vmatprep.subr.mxu0 0.0
        %1393 = vmatpush1.msra.mxu0 %v1195
        %1394 = vmatprep.subr.mxu0 0.0
        %1395 = vmatpush1.msra.mxu0 %v1200
        %1396 = vmatprep.subr.mxu0 0.0
        %1397 = vmatpush1.msra.mxu0 0.0
        %1398 = vmatprep.subr.mxu0 0.0
        %1399 = vmatpush1.msra.mxu0 0.0
        %1400 = vmatprep.subr.mxu0 0.0
        %1401 = vmatpush1.msra.mxu0 0.0
        %1402 = vmatprep.subr.mxu0 0.0
        %1403 = vmatpush1.msra.mxu0 0.0
        %1404 = vmatprep.subr.mxu0 0.0
        %1405 = vmatpush1.msra.mxu0 0.0
        %1406 = vmatprep.subr.mxu0 0.0
        %1407 = vmatpush1.msra.mxu0 0.0
        %1408 = vmatprep.subr.mxu0 0.0
        %1409 = vmatpush1.msra.mxu0 0.0
        %1410 = vmatprep.subr.mxu0 0.0
        %1411 = vmatpush1.msra.mxu0 0.0
        %1412 = vmatprep.subr.mxu0 0.0
        %1413 = vmatpush1.msra.mxu0 0.0
        %1414 = vmatprep.subr.mxu0 0.0
        %1415 = vmatpush1.msra.mxu0 0.0
        %1416 = vmatprep.subr.mxu0 0.0
        %1417 = vmatpush1.msra.mxu0 0.0
        %1418 = vmatprep.subr.mxu0 0.0
        %1419 = vmatpush1.msra.mxu0 0.0
        %1420 = vmatprep.subr.mxu0 0.0
        %1421 = vmatpush1.msra.mxu0 0.0
        %1422 = vmatprep.subr.mxu0 0.0
        %1423 = vmatpush1.msra.mxu0 0.0
        %1424 = vmatprep.subr.mxu0 0.0
        %1425 = vmatpush1.msra.mxu0 0.0
        %1426 = vmatprep.subr.mxu0 0.0
        %1427 = vmatpush1.msra.mxu0 0.0
        %1428 = vmatprep.subr.mxu0 0.0
        %1429 = vmatpush1.msra.mxu0 0.0
        %1430 = vmatprep.subr.mxu0 0.0
        %1431 = vmatpush1.msra.mxu0 0.0
        %1432 = vmatprep.subr.mxu0 0.0
        %1433 = vmatpush1.msra.mxu0 0.0
        %1434 = vmatprep.subr.mxu0 0.0
        %1435 = vmatpush1.msra.mxu0 0.0
        %1436 = vmatprep.subr.mxu0 0.0
        %1437 = vmatpush1.msra.mxu0 0.0
        %1438 = vmatprep.subr.mxu0 0.0
        %1439 = vmatpush1.msra.mxu0 0.0
        %1440 = vmatprep.subr.mxu0 0.0
        %1441 = vmatpush1.msra.mxu0 0.0
        %1442 = vmatprep.subr.mxu0 0.0
        %1443 = vmatpush1.msra.mxu0 0.0
        %1444 = vmatprep.subr.mxu0 0.0
        %1445 = vmatpush1.msra.mxu0 0.0
        %1446 = vmatprep.subr.mxu0 0.0
        %1447 = vmatpush1.msra.mxu0 0.0
        %1448 = vmatprep.subr.mxu0 0.0
        %1449 = vmatpush1.msra.mxu0 0.0
        %1450 = vmatprep.subr.mxu0 0.0
        %1451 = vmatpush1.msra.mxu0 0.0
        %1452 = vmatprep.subr.mxu0 0.0
        %1453 = vmatpush1.msra.mxu0 0.0
        %1454 = vmatprep.subr.mxu0 0.0
        %1455 = vmatpush1.msra.mxu0 0.0
        %1456 = vmatprep.mubr.f32.mxu0 0.0
        %1457 = vmatmul.mubr.f32.gmra.mrb[0].mxu0 %v1390
        %v1458 = vpop.f32.mrb[0].mxu0
        %v1459 = vadd.f32 %v1289, %v1458
        %v1460 = vpop.f32.mrb[0].mxu0
        %1461 = vdwg.mxu0
        %v1462 = vadd.f32 %v1459, %v1381
        %v1463 = vmax.f32 %v1462, 0.0
        %1464 = vst.msk [vmem:[#allocation2] sm:$0xff] %vm1118, %v1385
        %1465 = vst.msk [vmem:[#allocation2 + $0x8] sm:$0xff] %vm1118, %v1386
        %1466 = vst.msk [vmem:[#allocation2 + $0x10] sm:$0xff] %vm1118, %v1463
        %v1467 = vld [vmem:[#allocation3] sm:$0xff]
        %v1468 = vld [vmem:[#allocation3 + $0x8] sm:$0xff]
        %v1469 = vld [vmem:[%s752] sm:$0xff]
        %v1470 = vld [vmem:[%s752 + $0x8] sm:$0xff]
        %v1471 = vld [vmem:[%s752 + $0x10] sm:$0xff]
        %v1472 = vld [vmem:[%s752 + $0x18] sm:$0xff]
        %v1474 = vsel %vm1118, %v1385, 0
        %v1477 = vsel %vm1118, %v1386, 0
        %1479 = vmatprep.subr.mxu0 0.0
        %1480 = vmatpush1.msra.mxu0 %v1469
        %1481 = vmatprep.subr.mxu0 0.0
        %1482 = vmatpush1.msra.mxu0 %v1470
        %1483 = vmatprep.subr.mxu0 0.0
        %1484 = vmatpush1.msra.mxu0 %v1471
        %1485 = vmatprep.subr.mxu0 0.0
        %1486 = vmatpush1.msra.mxu0 %v1472
        %1487 = vmatprep.subr.mxu0 0.0
        %1488 = vmatpush1.msra.mxu0 0.0
        %1489 = vmatprep.subr.mxu0 0.0
        %1490 = vmatpush1.msra.mxu0 0.0
        %1491 = vmatprep.subr.mxu0 0.0
        %1492 = vmatpush1.msra.mxu0 0.0
        %1493 = vmatprep.subr.mxu0 0.0
        %1494 = vmatpush1.msra.mxu0 0.0
        %1495 = vmatprep.subr.mxu0 0.0
        %1496 = vmatpush1.msra.mxu0 0.0
        %1497 = vmatprep.subr.mxu0 0.0
        %1498 = vmatpush1.msra.mxu0 0.0
        %1499 = vmatprep.subr.mxu0 0.0
        %1500 = vmatpush1.msra.mxu0 0.0
        %1501 = vmatprep.subr.mxu0 0.0
        %1502 = vmatpush1.msra.mxu0 0.0
        %1503 = vmatprep.subr.mxu0 0.0
        %1504 = vmatpush1.msra.mxu0 0.0
        %1505 = vmatprep.subr.mxu0 0.0
        %1506 = vmatpush1.msra.mxu0 0.0
        %1507 = vmatprep.subr.mxu0 0.0
        %1508 = vmatpush1.msra.mxu0 0.0
        %1509 = vmatprep.subr.mxu0 0.0
        %1510 = vmatpush1.msra.mxu0 0.0
        %1511 = vmatprep.subr.mxu0 0.0
        %1512 = vmatpush1.msra.mxu0 0.0
        %1513 = vmatprep.subr.mxu0 0.0
        %1514 = vmatpush1.msra.mxu0 0.0
        %1515 = vmatprep.subr.mxu0 0.0
        %1516 = vmatpush1.msra.mxu0 0.0
        %1517 = vmatprep.subr.mxu0 0.0
        %1518 = vmatpush1.msra.mxu0 0.0
        %1519 = vmatprep.subr.mxu0 0.0
        %1520 = vmatpush1.msra.mxu0 0.0
        %1521 = vmatprep.subr.mxu0 0.0
        %1522 = vmatpush1.msra.mxu0 0.0
        %1523 = vmatprep.subr.mxu0 0.0
        %1524 = vmatpush1.msra.mxu0 0.0
        %1525 = vmatprep.subr.mxu0 0.0
        %1526 = vmatpush1.msra.mxu0 0.0
        %1527 = vmatprep.subr.mxu0 0.0
        %1528 = vmatpush1.msra.mxu0 0.0
        %1529 = vmatprep.subr.mxu0 0.0
        %1530 = vmatpush1.msra.mxu0 0.0
        %1531 = vmatprep.subr.mxu0 0.0
        %1532 = vmatpush1.msra.mxu0 0.0
        %1533 = vmatprep.subr.mxu0 0.0
        %1534 = vmatpush1.msra.mxu0 0.0
        %1535 = vmatprep.subr.mxu0 0.0
        %1536 = vmatpush1.msra.mxu0 0.0
        %1537 = vmatprep.subr.mxu0 0.0
        %1538 = vmatpush1.msra.mxu0 0.0
        %1539 = vmatprep.subr.mxu0 0.0
        %1540 = vmatpush1.msra.mxu0 0.0
        %1541 = vmatprep.subr.mxu0 0.0
        %1542 = vmatpush1.msra.mxu0 0.0
        %1543 = vmatprep.mubr.f32.mxu0 0.0
        %1544 = vmatmul.mubr.f32.gmra.mrb[0].mxu0 %v1474
        %v1545 = vpop.f32.mrb[0].mxu0
        %v1546 = vadd.f32 0.0, %v1545
        %v1547 = vpop.f32.mrb[0].mxu0
        %1548 = vmatprep.mubr.f32.mxu0 0.0
        %1549 = vmatmul.mubr.f32.gmra.mrb[0].mxu0 %v1477
        %v1550 = vpop.f32.mrb[0].mxu0
        %v1551 = vadd.f32 0.0, %v1550
        %v1552 = vpop.f32.mrb[0].mxu0
        %1553 = vdwg.mxu0
        %v1554 = vadd.f32 %v1467, %v1546
        %v1555 = vadd.f32 %v1468, %v1551
        %1556 = vst.msk [vmem:[#allocation3] sm:$0xff] %vm1118, %v1554
        %1557 = vst.msk [vmem:[#allocation3 + $0x8] sm:$0xff] %vm1118, %v1555
        %p1558 = scmp.eq.s32.totalorder %s36, 1
        // Predicated region
        $region149: #{tpu_custom_call.1} parent=99 // pred_check
          %p1559 = pneg %p1558
        $region150: #{tpu_custom_call.1} parent=99 // pred_check_branch
          %1561 = sbr.rel (%p1559) target = $region152
        $region151: #{tpu_custom_call.1} parent=99 // pred_region
          %v1562 = vld [vmem:[#allocation3] sm:$0xff]
          %v1563 = vld [vmem:[#allocation3 + $0x8] sm:$0xff]
          %v1564 = vld [vmem:[%s13] sm:$0x1]
          %v1566 = vlaneseq
          %v1567 = vshrl.u32 %v1566, 7
          %v1568 = vsub.s32 0, %v1567
          %v1569 = vrot.slane %v1564, %v1568
          %v1571 = vadd.f32 %v1562, %v1569
          %v1572 = vadd.f32 %v1563, %v1569
          %v1573 = vmax.f32 %v1571, 0.0
          %v1574 = vmax.f32 %v1572, 0.0
          %v1575 = vld [vmem:[#allocation18] sm:$0xff]
          %v1576 = vld [vmem:[#allocation18 + $0x8] sm:$0xff]
          %v1577 = vld [vmem:[#allocation18 + $0x10] sm:$0xff]
          %v1578 = vld [vmem:[#allocation18 + $0x18] sm:$0xff]
          %v1579 = vld [vmem:[%s15] sm:$0x1]
          %v1581 = vlaneseq
          %v1582 = vshrl.u32 %v1581, 7
          %v1583 = vsub.s32 0, %v1582
          %v1584 = vrot.slane %v1579, %v1583
          %v1587 = vsel %vm1118, %v1573, 0
          %v1590 = vsel %vm1118, %v1574, 0
          %1592 = vmatprep.subr.mxu0 0.0
          %1593 = vmatpush1.msra.mxu0 %v1575
          %1594 = vmatprep.subr.mxu0 0.0
          %1595 = vmatpush1.msra.mxu0 %v1576
          %1596 = vmatprep.subr.mxu0 0.0
          %1597 = vmatpush1.msra.mxu0 %v1577
          %1598 = vmatprep.subr.mxu0 0.0
          %1599 = vmatpush1.msra.mxu0 %v1578
          %1600 = vmatprep.subr.mxu0 0.0
          %1601 = vmatpush1.msra.mxu0 0.0
          %1602 = vmatprep.subr.mxu0 0.0
          %1603 = vmatpush1.msra.mxu0 0.0
          %1604 = vmatprep.subr.mxu0 0.0
          %1605 = vmatpush1.msra.mxu0 0.0
          %1606 = vmatprep.subr.mxu0 0.0
          %1607 = vmatpush1.msra.mxu0 0.0
          %1608 = vmatprep.subr.mxu0 0.0
          %1609 = vmatpush1.msra.mxu0 0.0
          %1610 = vmatprep.subr.mxu0 0.0
          %1611 = vmatpush1.msra.mxu0 0.0
          %1612 = vmatprep.subr.mxu0 0.0
          %1613 = vmatpush1.msra.mxu0 0.0
          %1614 = vmatprep.subr.mxu0 0.0
          %1615 = vmatpush1.msra.mxu0 0.0
          %1616 = vmatprep.subr.mxu0 0.0
          %1617 = vmatpush1.msra.mxu0 0.0
          %1618 = vmatprep.subr.mxu0 0.0
          %1619 = vmatpush1.msra.mxu0 0.0
          %1620 = vmatprep.subr.mxu0 0.0
          %1621 = vmatpush1.msra.mxu0 0.0
          %1622 = vmatprep.subr.mxu0 0.0
          %1623 = vmatpush1.msra.mxu0 0.0
          %1624 = vmatprep.subr.mxu0 0.0
          %1625 = vmatpush1.msra.mxu0 0.0
          %1626 = vmatprep.subr.mxu0 0.0
          %1627 = vmatpush1.msra.mxu0 0.0
          %1628 = vmatprep.subr.mxu0 0.0
          %1629 = vmatpush1.msra.mxu0 0.0
          %1630 = vmatprep.subr.mxu0 0.0
          %1631 = vmatpush1.msra.mxu0 0.0
          %1632 = vmatprep.subr.mxu0 0.0
          %1633 = vmatpush1.msra.mxu0 0.0
          %1634 = vmatprep.subr.mxu0 0.0
          %1635 = vmatpush1.msra.mxu0 0.0
          %1636 = vmatprep.subr.mxu0 0.0
          %1637 = vmatpush1.msra.mxu0 0.0
          %1638 = vmatprep.subr.mxu0 0.0
          %1639 = vmatpush1.msra.mxu0 0.0
          %1640 = vmatprep.subr.mxu0 0.0
          %1641 = vmatpush1.msra.mxu0 0.0
          %1642 = vmatprep.subr.mxu0 0.0
          %1643 = vmatpush1.msra.mxu0 0.0
          %1644 = vmatprep.subr.mxu0 0.0
          %1645 = vmatpush1.msra.mxu0 0.0
          %1646 = vmatprep.subr.mxu0 0.0
          %1647 = vmatpush1.msra.mxu0 0.0
          %1648 = vmatprep.subr.mxu0 0.0
          %1649 = vmatpush1.msra.mxu0 0.0
          %1650 = vmatprep.subr.mxu0 0.0
          %1651 = vmatpush1.msra.mxu0 0.0
          %1652 = vmatprep.subr.mxu0 0.0
          %1653 = vmatpush1.msra.mxu0 0.0
          %1654 = vmatprep.subr.mxu0 0.0
          %1655 = vmatpush1.msra.mxu0 0.0
          %1656 = vmatprep.mubr.f32.mxu0 0.0
          %1657 = vmatmul.mubr.f32.gmra.mrb[0].mxu0 %v1587
          %v1658 = vpop.f32.mrb[0].mxu0
          %v1659 = vadd.f32 %v1584, %v1658
          %v1660 = vpop.f32.mrb[0].mxu0
          %1661 = vmatprep.mubr.f32.mxu0 0.0
          %1662 = vmatmul.mubr.f32.gmra.mrb[0].mxu0 %v1590
          %v1663 = vpop.f32.mrb[0].mxu0
          %v1664 = vadd.f32 %v1584, %v1663
          %v1665 = vpop.f32.mrb[0].mxu0
          %1666 = vdwg.mxu0
          %v1667 = vmax.f32 %v1659, 0.0
          %v1668 = vmax.f32 %v1664, 0.0
          %v1669 = vld [vmem:[#allocation19] sm:$0xff]
          %v1670 = vld [vmem:[#allocation19 + $0x8] sm:$0xff]
          %v1671 = vld [vmem:[#allocation19 + $0x10] sm:$0xff]
          %v1672 = vld [vmem:[#allocation19 + $0x18] sm:$0xff]
          %v1673 = vld [vmem:[%s17] sm:$0x1]
          %v1675 = vlaneseq
          %v1676 = vshrl.u32 %v1675, 7
          %v1677 = vsub.s32 0, %v1676
          %v1678 = vrot.slane %v1673, %v1677
          %v1681 = vsel %vm1118, %v1667, 0
          %v1684 = vsel %vm1118, %v1668, 0
          %1686 = vmatprep.subr.mxu0 0.0
          %1687 = vmatpush1.msra.mxu0 %v1669
          %1688 = vmatprep.subr.mxu0 0.0
          %1689 = vmatpush1.msra.mxu0 %v1670
          %1690 = vmatprep.subr.mxu0 0.0
          %1691 = vmatpush1.msra.mxu0 %v1671
          %1692 = vmatprep.subr.mxu0 0.0
          %1693 = vmatpush1.msra.mxu0 %v1672
          %1694 = vmatprep.subr.mxu0 0.0
          %1695 = vmatpush1.msra.mxu0 0.0
          %1696 = vmatprep.subr.mxu0 0.0
          %1697 = vmatpush1.msra.mxu0 0.0
          %1698 = vmatprep.subr.mxu0 0.0
          %1699 = vmatpush1.msra.mxu0 0.0
          %1700 = vmatprep.subr.mxu0 0.0
          %1701 = vmatpush1.msra.mxu0 0.0
          %1702 = vmatprep.subr.mxu0 0.0
          %1703 = vmatpush1.msra.mxu0 0.0
          %1704 = vmatprep.subr.mxu0 0.0
          %1705 = vmatpush1.msra.mxu0 0.0
          %1706 = vmatprep.subr.mxu0 0.0
          %1707 = vmatpush1.msra.mxu0 0.0
          %1708 = vmatprep.subr.mxu0 0.0
          %1709 = vmatpush1.msra.mxu0 0.0
          %1710 = vmatprep.subr.mxu0 0.0
          %1711 = vmatpush1.msra.mxu0 0.0
          %1712 = vmatprep.subr.mxu0 0.0
          %1713 = vmatpush1.msra.mxu0 0.0
          %1714 = vmatprep.subr.mxu0 0.0
          %1715 = vmatpush1.msra.mxu0 0.0
          %1716 = vmatprep.subr.mxu0 0.0
          %1717 = vmatpush1.msra.mxu0 0.0
          %1718 = vmatprep.subr.mxu0 0.0
          %1719 = vmatpush1.msra.mxu0 0.0
          %1720 = vmatprep.subr.mxu0 0.0
          %1721 = vmatpush1.msra.mxu0 0.0
          %1722 = vmatprep.subr.mxu0 0.0
          %1723 = vmatpush1.msra.mxu0 0.0
          %1724 = vmatprep.subr.mxu0 0.0
          %1725 = vmatpush1.msra.mxu0 0.0
          %1726 = vmatprep.subr.mxu0 0.0
          %1727 = vmatpush1.msra.mxu0 0.0
          %1728 = vmatprep.subr.mxu0 0.0
          %1729 = vmatpush1.msra.mxu0 0.0
          %1730 = vmatprep.subr.mxu0 0.0
          %1731 = vmatpush1.msra.mxu0 0.0
          %1732 = vmatprep.subr.mxu0 0.0
          %1733 = vmatpush1.msra.mxu0 0.0
          %1734 = vmatprep.subr.mxu0 0.0
          %1735 = vmatpush1.msra.mxu0 0.0
          %1736 = vmatprep.subr.mxu0 0.0
          %1737 = vmatpush1.msra.mxu0 0.0
          %1738 = vmatprep.subr.mxu0 0.0
          %1739 = vmatpush1.msra.mxu0 0.0
          %1740 = vmatprep.subr.mxu0 0.0
          %1741 = vmatpush1.msra.mxu0 0.0
          %1742 = vmatprep.subr.mxu0 0.0
          %1743 = vmatpush1.msra.mxu0 0.0
          %1744 = vmatprep.subr.mxu0 0.0
          %1745 = vmatpush1.msra.mxu0 0.0
          %1746 = vmatprep.subr.mxu0 0.0
          %1747 = vmatpush1.msra.mxu0 0.0
          %1748 = vmatprep.subr.mxu0 0.0
          %1749 = vmatpush1.msra.mxu0 0.0
          %1750 = vmatprep.mubr.f32.mxu0 0.0
          %1751 = vmatmul.mubr.f32.gmra.mrb[0].mxu0 %v1681
          %v1752 = vpop.f32.mrb[0].mxu0
          %v1753 = vadd.f32 %v1678, %v1752
          %v1754 = vpop.f32.mrb[0].mxu0
          %1755 = vmatprep.mubr.f32.mxu0 0.0
          %1756 = vmatmul.mubr.f32.gmra.mrb[0].mxu0 %v1684
          %v1757 = vpop.f32.mrb[0].mxu0
          %v1758 = vadd.f32 %v1678, %v1757
          %v1759 = vpop.f32.mrb[0].mxu0
          %1760 = vdwg.mxu0
          %v1761 = vmax.f32 %v1753, 0.0
          %v1762 = vmax.f32 %v1758, 0.0
          %v1763 = vld [vmem:[%s18] sm:$0xff]
          %v1764 = vld [vmem:[%s18 + $0x8] sm:$0xff]
          %v1765 = vld [vmem:[%s18 + $0x10] sm:$0xff]
          %v1766 = vld [vmem:[%s18 + $0x18] sm:$0xff]
          %v1767 = vld [vmem:[%s19] sm:$0x1]
          %v1769 = vlaneseq
          %v1770 = vshrl.u32 %v1769, 7
          %v1771 = vsub.s32 0, %v1770
          %v1772 = vrot.slane %v1767, %v1771
          %v1775 = vsel %vm1118, %v1761, 0
          %v1778 = vsel %vm1118, %v1762, 0
          %1780 = vmatprep.subr.mxu0 0.0
          %1781 = vmatpush1.msra.mxu0 %v1763
          %1782 = vmatprep.subr.mxu0 0.0
          %1783 = vmatpush1.msra.mxu0 %v1764
          %1784 = vmatprep.subr.mxu0 0.0
          %1785 = vmatpush1.msra.mxu0 %v1765
          %1786 = vmatprep.subr.mxu0 0.0
          %1787 = vmatpush1.msra.mxu0 %v1766
          %1788 = vmatprep.subr.mxu0 0.0
          %1789 = vmatpush1.msra.mxu0 0.0
          %1790 = vmatprep.subr.mxu0 0.0
          %1791 = vmatpush1.msra.mxu0 0.0
          %1792 = vmatprep.subr.mxu0 0.0
          %1793 = vmatpush1.msra.mxu0 0.0
          %1794 = vmatprep.subr.mxu0 0.0
          %1795 = vmatpush1.msra.mxu0 0.0
          %1796 = vmatprep.subr.mxu0 0.0
          %1797 = vmatpush1.msra.mxu0 0.0
          %1798 = vmatprep.subr.mxu0 0.0
          %1799 = vmatpush1.msra.mxu0 0.0
          %1800 = vmatprep.subr.mxu0 0.0
          %1801 = vmatpush1.msra.mxu0 0.0
          %1802 = vmatprep.subr.mxu0 0.0
          %1803 = vmatpush1.msra.mxu0 0.0
          %1804 = vmatprep.subr.mxu0 0.0
          %1805 = vmatpush1.msra.mxu0 0.0
          %1806 = vmatprep.subr.mxu0 0.0
          %1807 = vmatpush1.msra.mxu0 0.0
          %1808 = vmatprep.subr.mxu0 0.0
          %1809 = vmatpush1.msra.mxu0 0.0
          %1810 = vmatprep.subr.mxu0 0.0
          %1811 = vmatpush1.msra.mxu0 0.0
          %1812 = vmatprep.subr.mxu0 0.0
          %1813 = vmatpush1.msra.mxu0 0.0
          %1814 = vmatprep.subr.mxu0 0.0
          %1815 = vmatpush1.msra.mxu0 0.0
          %1816 = vmatprep.subr.mxu0 0.0
          %1817 = vmatpush1.msra.mxu0 0.0
          %1818 = vmatprep.subr.mxu0 0.0
          %1819 = vmatpush1.msra.mxu0 0.0
          %1820 = vmatprep.subr.mxu0 0.0
          %1821 = vmatpush1.msra.mxu0 0.0
          %1822 = vmatprep.subr.mxu0 0.0
          %1823 = vmatpush1.msra.mxu0 0.0
          %1824 = vmatprep.subr.mxu0 0.0
          %1825 = vmatpush1.msra.mxu0 0.0
          %1826 = vmatprep.subr.mxu0 0.0
          %1827 = vmatpush1.msra.mxu0 0.0
          %1828 = vmatprep.subr.mxu0 0.0
          %1829 = vmatpush1.msra.mxu0 0.0
          %1830 = vmatprep.subr.mxu0 0.0
          %1831 = vmatpush1.msra.mxu0 0.0
          %1832 = vmatprep.subr.mxu0 0.0
          %1833 = vmatpush1.msra.mxu0 0.0
          %1834 = vmatprep.subr.mxu0 0.0
          %1835 = vmatpush1.msra.mxu0 0.0
          %1836 = vmatprep.subr.mxu0 0.0
          %1837 = vmatpush1.msra.mxu0 0.0
          %1838 = vmatprep.subr.mxu0 0.0
          %1839 = vmatpush1.msra.mxu0 0.0
          %1840 = vmatprep.subr.mxu0 0.0
          %1841 = vmatpush1.msra.mxu0 0.0
          %1842 = vmatprep.subr.mxu0 0.0
          %1843 = vmatpush1.msra.mxu0 0.0
          %1844 = vmatprep.mubr.f32.mxu0 0.0
          %1845 = vmatmul.mubr.f32.gmra.mrb[0].mxu0 %v1775
          %v1846 = vpop.f32.mrb[0].mxu0
          %v1847 = vadd.f32 %v1772, %v1846
          %v1848 = vpop.f32.mrb[0].mxu0
          %1849 = vmatprep.mubr.f32.mxu0 0.0
          %1850 = vmatmul.mubr.f32.gmra.mrb[0].mxu0 %v1778
          %v1851 = vpop.f32.mrb[0].mxu0
          %v1852 = vadd.f32 %v1772, %v1851
          %v1853 = vpop.f32.mrb[0].mxu0
          %1854 = vdwg.mxu0
          %v1855 = vmax.f32 %v1847, 0.0
          %v1856 = vmax.f32 %v1852, 0.0
          %1859 = vrot.lane.b32.xlu0 %v1855, 32
          %v1860 = vpop.permute.xlu0 %1859
          %1861 = vrot.lane.b32.xlu0 %v1856, 32
          %v1862 = vpop.permute.xlu0 %1861
          %v1865 = vsel %vm1118, %v1761, %v1860
          %v1866 = vsel %vm1118, %v1762, %v1862
          %vm1867 = vcmask 293888
          %1868 = vst.msk [vmem:[#allocation20] sm:$0xff] %vm1867, %v1865
          %1869 = vst.msk [vmem:[#allocation20 + $0x8] sm:$0xff] %vm1867, %v1866
        $region152: #{tpu_custom_call.1} parent=99 // pred_fallthru
          _
        // Predicated region
        $region153: #{tpu_custom_call.1} parent=99 // pred_check
          %p1870 = pneg %p489
        $region154: #{tpu_custom_call.1} parent=99 // pred_check_branch
          %1872 = sbr.rel (%p1870) target = $region156
        $region155: #{tpu_custom_call.1} parent=99 // pred_region
          %s1874 = ssub.s32 256, 256
          %1875 = vsyncadd [#allocation6], %s1874
          %s1876 = sshll.u32 [#allocation20], 4
          %s1877 = int_to_ptr.vmem [resolvable:$true] %s1876
          %1882 = dma.vmem_to_hbm [thread:$0]  %s1877, 256, %s20, [#allocation6], 128, 128, 8
        $region156: #{tpu_custom_call.1} parent=99 // pred_fallthru
          _
        // Predicated region
        $region157: #{tpu_custom_call.1} parent=99 // pred_check
          %p1883 = pneg %p489
        $region158: #{tpu_custom_call.1} parent=99 // pred_check_branch
          %1885 = sbr.rel (%p1883) target = $region160
        $region159: #{tpu_custom_call.1} parent=99 // pred_region
          %1886 = dma.done [#allocation6], 256
        $region160: #{tpu_custom_call.1} parent=99 // pred_fallthru
          _
      $region100: #{tpu_custom_call.1} parent=5 // pred_fallthru
        _
      %p1887 = scmp.le.s32.totalorder 2, %s31
      // Predicated region
      $region161: #{tpu_custom_call.1} parent=5 // pred_check
        %p1888 = pneg %p1887
      $region162: #{tpu_custom_call.1} parent=5 // pred_check_branch
        %1890 = sbr.rel (%p1888) target = $region164
      $region163: #{tpu_custom_call.1} parent=5 // pred_region
        %s1891 = ssub.s32 %s31, 2
      $region164: #{tpu_custom_call.1} parent=5 // pred_fallthru
        _
    $region6: #{tpu_custom_call.1} parent=1 // loop_footer
      %s35 = sadd.s32 1, %s31
    $region7: #{tpu_custom_call.1} parent=1 // loop_footer_branch
      %30 = sbr.rel target = $region3
    $region8: #{tpu_custom_call.1} parent=1 // loop_exit
      _
    %1892 = vsyncpa [#allocation5], 1
    %s1893 = scalar_lea.sflag [#allocation5], 1
    %1894 = vsyncpa %s1893, 1
    %1895 = vsyncpa [#allocation8], 1
    %1896 = vsyncpa [#allocation11], 1
    %1897 = vsyncpa [#allocation14], 1
    %1898 = vsyncpa [#allocation6], 1
    %s1899 = scalar_lea.sflag [#allocation6], 1
    %1900 = vsyncpa %s1899, 1

</llo_original>
